<compile_context>
chip_gen: v7x
topology: tpu7x:2x2x1
jax: 0.10.0
libtpu: 0.0.40
codegen_flags: <defaults>
</compile_context>

<pallas_src>
import functools

import jax
import jax.numpy as jnp
from jax import lax
from jax.experimental import pallas as pl
from jax.experimental.pallas import tpu as pltpu


# --------------------------- fused Pallas kernel -----------------------------

def _preact_block_kernel(x_ref, mask_ref, w1_ref, w2_ref, bn_ref, o_ref,
                         *, H, W, B, dot_dtype):
    """B images per grid step. Activations are channel-major (C, B*HW)."""
    HW = H * W
    BHW = B * HW
    C = x_ref.shape[1]

    # (C, B*HW): the B images of this block, concatenated along the lane axis.
    if B == 1:
        x = x_ref[0]
    else:
        x = jnp.concatenate([x_ref[b] for b in range(B)], axis=1)

    # Packed eval-mode BN params: columns are (s1, b1, s2, b2), each (C, 1).
    s1 = bn_ref[:, 0:1]
    b1 = bn_ref[:, 1:2]
    s2 = bn_ref[:, 2:3]
    b2 = bn_ref[:, 3:4]

    # Precomputed 0/1 boundary masks, (1, B*HW) each; shared by both convs and
    # broadcast along sublanes (channels) by the multiply below.
    masks = [mask_ref[t:t + 1, :].astype(dot_dtype) for t in range(9)]

    offsets = [(dy, dx) for dy in (-1, 0, 1) for dx in (-1, 0, 1)]

    def im2col(a):
        # a: (C, B*HW) -> (9*C, B*HW). Row t*C + c holds channel c shifted by the
        # t-th tap offset, with zero fill at image boundaries via the mask table.
        a = a.astype(dot_dtype)
        taps = []
        for t, (dy, dx) in enumerate(offsets):
            s = dy * W + dx
            if s == 0:
                taps.append(a)                                   # centre: all-true mask
            else:
                taps.append(pltpu.roll(a, (-s) % BHW, axis=1) * masks[t])
        return jnp.concatenate(taps, axis=0)

    # BN1 + ReLU  ->  conv1 (3x3, pad=1) as one stacked-K MXU matmul.
    pre1 = jnp.maximum(x * s1 + b1, 0.0)
    h = jnp.dot(w1_ref[...], im2col(pre1), preferred_element_type=jnp.float32)

    # BN2 + ReLU  ->  conv2 (3x3, pad=1).
    pre2 = jnp.maximum(h * s2 + b2, 0.0)
    y = jnp.dot(w2_ref[...], im2col(pre2), preferred_element_type=jnp.float32)

    # Identity residual in f32; no activation after the add (matches the module).
    out = y + x
    for b in range(B):
        o_ref[b] = out[:, b * HW:(b + 1) * HW]


# --------------------------- wrapper ------------------------------------------

def _pick_images_per_block(N, max_b=8):
    """Largest divisor of N that is <= max_b while leaving >= 2 grid blocks
    (so both v7x TensorCores get work under dimension_semantics=('parallel',))."""
    if N <= 1:
        return 1
    best = 1
    for b in range(1, min(max_b, N) + 1):
        if N % b == 0 and N // b >= 2:
            best = b
    return best


def _make_tap_masks(H, W, B):
    """(9, B*HW) f32 table: mask[t, :] is 1 where the t-th 3x3 tap is in-bounds."""
    HW = H * W
    yy, xx = jnp.meshgrid(jnp.arange(H), jnp.arange(W), indexing='ij')
    yy = yy.reshape(1, HW)
    xx = xx.reshape(1, HW)
    rows = []
    for dy in (-1, 0, 1):
        for dx in (-1, 0, 1):
            rows.append((yy + dy >= 0) & (yy + dy < H) & (xx + dx >= 0) & (xx + dx < W))
    base = jnp.concatenate(rows, axis=0).astype(jnp.float32)        # (9, HW)
    return jnp.tile(base, (1, B))                                   # (9, B*HW)


def preact_resblock_forward(x_nchw, params, *, images_per_block=None,
                            dot_dtype=jnp.float32):
    N, C, H, W = x_nchw.shape
    HW = H * W
    Cout = params['w1_mat'].shape[0]
    assert Cout == C, "identity residual requires in_channel == out_channel"

    B = _pick_images_per_block(N) if images_per_block is None else images_per_block
    assert N % B == 0, "images_per_block must divide the batch"
    G = N // B

    x_flat = x_nchw.reshape(N, C, HW)                 # free: already channel-major
    masks = _make_tap_masks(H, W, B)                  # (9, B*HW) f32 constant table

    w1 = params['w1_mat'].astype(dot_dtype)           # (Cout, 9*C)   im2col layout
    w2 = params['w2_mat'].astype(dot_dtype)           # (Cout, 9*Cout)
    bn = params['bn_pack']                            # (C, 4) = [s1, b1, s2, b2]

    kernel = functools.partial(_preact_block_kernel, H=H, W=W, B=B,
                               dot_dtype=dot_dtype)
    out_flat = pl.pallas_call(
        kernel,
        out_shape=jax.ShapeDtypeStruct((N, Cout, HW), jnp.float32),
        grid=(G,),
        in_specs=[
            pl.BlockSpec((B, C, HW), lambda n: (n, 0, 0)),       # x (B images)
            pl.BlockSpec((9, B * HW), lambda n: (0, 0)),         # boundary masks
            pl.BlockSpec((Cout, 9 * C), lambda n: (0, 0)),       # conv1 weight
            pl.BlockSpec((Cout, 9 * Cout), lambda n: (0, 0)),    # conv2 weight
            pl.BlockSpec((C, 4), lambda n: (0, 0)),              # packed BN params
        ],
        out_specs=pl.BlockSpec((B, Cout, HW), lambda n: (n, 0, 0)),
        compiler_params=pltpu.CompilerParams(
            dimension_semantics=("parallel",),                   # v7x: 2 TCs split the grid
            vmem_limit_bytes=32 * 1024 * 1024),
    )(x_flat, masks, w1, w2, bn)

    return out_flat.reshape(N, Cout, H, W)


# --------------------------- reference (pure JAX) -----------------------------

def ref_forward(x, raw, eps=1e-5):
    dn = ('NCHW', 'OIHW', 'NCHW')

    def bn(y, g, b, m, v):
        sc = g / jnp.sqrt(v + eps)
        return (y - m[None, :, None, None]) * sc[None, :, None, None] \
            + b[None, :, None, None]

    h = jnp.maximum(bn(x, *raw['bn1']), 0.0)
    h = lax.conv_general_dilated(h, raw['w1'], (1, 1), ((1, 1), (1, 1)),
                                 dimension_numbers=dn)
    h = jnp.maximum(bn(h, *raw['bn2']), 0.0)
    h = lax.conv_general_dilated(h, raw['w2'], (1, 1), ((1, 1), (1, 1)),
                                 dimension_numbers=dn)
    return h + x                                  # identity shortcut, no final ReLU


# --------------------------- param construction ------------------------------

def make_params(key, in_ch, out_ch, eps=1e-5):
    ks = jax.random.split(key, 4)
    w1 = jax.random.normal(ks[0], (out_ch, in_ch, 3, 3), jnp.float32) / jnp.sqrt(9 * in_ch)
    w2 = jax.random.normal(ks[1], (out_ch, out_ch, 3, 3), jnp.float32) / jnp.sqrt(9 * out_ch)

    def bn_raw(k, c):
        k1, k2, k3, k4 = jax.random.split(k, 4)
        gamma = 1.0 + 0.2 * jax.random.normal(k1, (c,), jnp.float32)
        beta = 0.1 * jax.random.normal(k2, (c,), jnp.float32)
        mean = 0.1 * jax.random.normal(k3, (c,), jnp.float32)
        var = 0.5 + jax.random.uniform(k4, (c,), jnp.float32)
        return gamma, beta, mean, var

    bn1 = bn_raw(ks[2], in_ch)
    bn2 = bn_raw(ks[3], out_ch)

    def fold(bn):
        g, b, m, v = bn
        s = g / jnp.sqrt(v + eps)
        return s, b - m * s

    s1, b1 = fold(bn1)
    s2, b2 = fold(bn2)

    # im2col weight layout: w_mat[o, (ky*3+kx)*Cin + i] = w[o, i, ky, kx]
    w1_mat = jnp.transpose(w1, (0, 2, 3, 1)).reshape(out_ch, 9 * in_ch)
    w2_mat = jnp.transpose(w2, (0, 2, 3, 1)).reshape(out_ch, 9 * out_ch)

    # Packed BN params (requires in_ch == out_ch, which the identity path implies).
    bn_pack = jnp.stack([s1, b1, s2, b2], axis=1)    # (C, 4)

    params = dict(w1_mat=w1_mat, w2_mat=w2_mat, bn_pack=bn_pack)
    raw = dict(w1=w1, w2=w2, bn1=bn1, bn2=bn2)
    return params, raw


# --------------------------- main ---------------------------------------------

if __name__ == "__main__":
    N, H, W = 2, 16, 16
    in_ch = out_ch = 32          # identity residual => in_channel == out_channel

    key = jax.random.PRNGKey(0)
    kx, kp = jax.random.split(key)
    x = jax.random.normal(kx, (N, in_ch, H, W), jnp.float32)    # NCHW like PyTorch

    params, raw = make_params(kp, in_ch, out_ch)

    out = jax.block_until_ready(preact_resblock_forward(x, params))
    ref = jax.block_until_ready(ref_forward(x, raw))

    assert out.shape == (N, out_ch, H, W)
    err = float(jnp.max(jnp.abs(out - ref)))
    assert err < 1e-3, err
    print("KERNEL_OK")
</pallas_src>

<mosaic_0001>
module attributes {stable_mosaic.version = 11 : i64} {
  func.func @_preact_block_kernel(%arg0: i32, %arg1: memref<1x32x256xf32, #tpu.memory_space<vmem>>, %arg2: memref<9x256xf32, #tpu.memory_space<vmem>>, %arg3: memref<32x288xf32, #tpu.memory_space<vmem>>, %arg4: memref<32x288xf32, #tpu.memory_space<vmem>>, %arg5: memref<32x4xf32, #tpu.memory_space<vmem>>, %arg6: memref<1x32x256xf32, #tpu.memory_space<vmem>>) attributes {dimension_semantics = [#tpu.dimension_semantics<parallel>], iteration_bounds = array<i64: 2>, scalar_prefetch = 0 : i64, scratch_operands = 0 : i64, tpu.core_type = #tpu.core_type<tc>, window_params = [{transform_indices = @transform_0, window_bounds = array<i64: 1, 32, 256>}, {pipeline_mode = #tpu.pipeline_mode<synchronous>, transform_indices = @transform_1, window_bounds = array<i64: 9, 256>}, {pipeline_mode = #tpu.pipeline_mode<synchronous>, transform_indices = @transform_2, window_bounds = array<i64: 32, 288>}, {pipeline_mode = #tpu.pipeline_mode<synchronous>, transform_indices = @transform_3, window_bounds = array<i64: 32, 288>}, {pipeline_mode = #tpu.pipeline_mode<synchronous>, transform_indices = @transform_4, window_bounds = array<i64: 32, 4>}, {transform_indices = @transform_5, window_bounds = array<i64: 1, 32, 256>}]} {
    %c0 = arith.constant 0 : index
    %c0_0 = arith.constant 0 : index
    %c0_1 = arith.constant 0 : index
    %0 = vector.load %arg1[%c0, %c0_0, %c0_1] : memref<1x32x256xf32, #tpu.memory_space<vmem>>, vector<1x32x256xf32>
    %1 = vector.shape_cast %0 : vector<1x32x256xf32> to vector<32x256xf32>
    %c0_2 = arith.constant 0 : index
    %c0_3 = arith.constant 0 : index
    %2 = vector.load %arg5[%c0_2, %c0_3] : memref<32x4xf32, #tpu.memory_space<vmem>>, vector<32x1xf32>
    %c0_4 = arith.constant 0 : index
    %c1 = arith.constant 1 : index
    %3 = vector.load %arg5[%c0_4, %c1] : memref<32x4xf32, #tpu.memory_space<vmem>>, vector<32x1xf32>
    %c0_5 = arith.constant 0 : index
    %c2 = arith.constant 2 : index
    %4 = vector.load %arg5[%c0_5, %c2] : memref<32x4xf32, #tpu.memory_space<vmem>>, vector<32x1xf32>
    %c0_6 = arith.constant 0 : index
    %c3 = arith.constant 3 : index
    %5 = vector.load %arg5[%c0_6, %c3] : memref<32x4xf32, #tpu.memory_space<vmem>>, vector<32x1xf32>
    %c0_7 = arith.constant 0 : index
    %c0_8 = arith.constant 0 : index
    %6 = vector.load %arg2[%c0_7, %c0_8] : memref<9x256xf32, #tpu.memory_space<vmem>>, vector<1x256xf32>
    %c1_9 = arith.constant 1 : index
    %c0_10 = arith.constant 0 : index
    %7 = vector.load %arg2[%c1_9, %c0_10] : memref<9x256xf32, #tpu.memory_space<vmem>>, vector<1x256xf32>
    %c2_11 = arith.constant 2 : index
    %c0_12 = arith.constant 0 : index
    %8 = vector.load %arg2[%c2_11, %c0_12] : memref<9x256xf32, #tpu.memory_space<vmem>>, vector<1x256xf32>
    %c3_13 = arith.constant 3 : index
    %c0_14 = arith.constant 0 : index
    %9 = vector.load %arg2[%c3_13, %c0_14] : memref<9x256xf32, #tpu.memory_space<vmem>>, vector<1x256xf32>
    %c5 = arith.constant 5 : index
    %c0_15 = arith.constant 0 : index
    %10 = vector.load %arg2[%c5, %c0_15] : memref<9x256xf32, #tpu.memory_space<vmem>>, vector<1x256xf32>
    %c6 = arith.constant 6 : index
    %c0_16 = arith.constant 0 : index
    %11 = vector.load %arg2[%c6, %c0_16] : memref<9x256xf32, #tpu.memory_space<vmem>>, vector<1x256xf32>
    %c7 = arith.constant 7 : index
    %c0_17 = arith.constant 0 : index
    %12 = vector.load %arg2[%c7, %c0_17] : memref<9x256xf32, #tpu.memory_space<vmem>>, vector<1x256xf32>
    %c8 = arith.constant 8 : index
    %c0_18 = arith.constant 0 : index
    %13 = vector.load %arg2[%c8, %c0_18] : memref<9x256xf32, #tpu.memory_space<vmem>>, vector<1x256xf32>
    %14 = vector.broadcast %2 : vector<32x1xf32> to vector<32x256xf32>
    %15 = arith.mulf %1, %14 : vector<32x256xf32>
    %16 = vector.broadcast %3 : vector<32x1xf32> to vector<32x256xf32>
    %17 = arith.addf %15, %16 : vector<32x256xf32>
    %cst = arith.constant 0.000000e+00 : f32
    %18 = vector.broadcast %cst : f32 to vector<32x256xf32>
    %19 = arith.maximumf %17, %18 : vector<32x256xf32>
    %c0_19 = arith.constant 0 : index
    %c0_20 = arith.constant 0 : index
    %20 = vector.load %arg3[%c0_19, %c0_20] : memref<32x288xf32, #tpu.memory_space<vmem>>, vector<32x288xf32>
    %c17_i32 = arith.constant 17 : i32
    %21 = tpu.dynamic_rotate %19 by %c17_i32 dim 1 : vector<32x256xf32>, i32 -> vector<32x256xf32>
    %22 = vector.broadcast %6 : vector<1x256xf32> to vector<32x256xf32>
    %23 = arith.mulf %21, %22 : vector<32x256xf32>
    %c16_i32 = arith.constant 16 : i32
    %24 = tpu.dynamic_rotate %19 by %c16_i32 dim 1 : vector<32x256xf32>, i32 -> vector<32x256xf32>
    %25 = vector.broadcast %7 : vector<1x256xf32> to vector<32x256xf32>
    %26 = arith.mulf %24, %25 : vector<32x256xf32>
    %c15_i32 = arith.constant 15 : i32
    %27 = tpu.dynamic_rotate %19 by %c15_i32 dim 1 : vector<32x256xf32>, i32 -> vector<32x256xf32>
    %28 = vector.broadcast %8 : vector<1x256xf32> to vector<32x256xf32>
    %29 = arith.mulf %27, %28 : vector<32x256xf32>
    %c1_i32 = arith.constant 1 : i32
    %30 = tpu.dynamic_rotate %19 by %c1_i32 dim 1 : vector<32x256xf32>, i32 -> vector<32x256xf32>
    %31 = vector.broadcast %9 : vector<1x256xf32> to vector<32x256xf32>
    %32 = arith.mulf %30, %31 : vector<32x256xf32>
    %c255_i32 = arith.constant 255 : i32
    %33 = tpu.dynamic_rotate %19 by %c255_i32 dim 1 : vector<32x256xf32>, i32 -> vector<32x256xf32>
    %34 = vector.broadcast %10 : vector<1x256xf32> to vector<32x256xf32>
    %35 = arith.mulf %33, %34 : vector<32x256xf32>
    %c241_i32 = arith.constant 241 : i32
    %36 = tpu.dynamic_rotate %19 by %c241_i32 dim 1 : vector<32x256xf32>, i32 -> vector<32x256xf32>
    %37 = vector.broadcast %11 : vector<1x256xf32> to vector<32x256xf32>
    %38 = arith.mulf %36, %37 : vector<32x256xf32>
    %c240_i32 = arith.constant 240 : i32
    %39 = tpu.dynamic_rotate %19 by %c240_i32 dim 1 : vector<32x256xf32>, i32 -> vector<32x256xf32>
    %40 = vector.broadcast %12 : vector<1x256xf32> to vector<32x256xf32>
    %41 = arith.mulf %39, %40 : vector<32x256xf32>
    %c239_i32 = arith.constant 239 : i32
    %42 = tpu.dynamic_rotate %19 by %c239_i32 dim 1 : vector<32x256xf32>, i32 -> vector<32x256xf32>
    %43 = vector.broadcast %13 : vector<1x256xf32> to vector<32x256xf32>
    %44 = arith.mulf %42, %43 : vector<32x256xf32>
    %45 = tpu.concatenate %23, %26, %29, %32, %19, %35, %38, %41, %44 in 0 : vector<32x256xf32>, vector<32x256xf32>, vector<32x256xf32>, vector<32x256xf32>, vector<32x256xf32>, vector<32x256xf32>, vector<32x256xf32>, vector<32x256xf32>, vector<32x256xf32> -> vector<288x256xf32>
    %cst_21 = arith.constant dense<0.000000e+00> : vector<32x256xf32>
    %46 = tpu.matmul %20, %45, %cst_21 {dimension_numbers = #tpu.dot_dimension_numbers<[1], [0], [0], [1], [0, 0, 1, 1], [], []>} : vector<32x288xf32>, vector<288x256xf32>, vector<32x256xf32> -> vector<32x256xf32>
    %47 = vector.broadcast %4 : vector<32x1xf32> to vector<32x256xf32>
    %48 = arith.mulf %46, %47 : vector<32x256xf32>
    %49 = vector.broadcast %5 : vector<32x1xf32> to vector<32x256xf32>
    %50 = arith.addf %48, %49 : vector<32x256xf32>
    %cst_22 = arith.constant 0.000000e+00 : f32
    %51 = vector.broadcast %cst_22 : f32 to vector<32x256xf32>
    %52 = arith.maximumf %50, %51 : vector<32x256xf32>
    %c0_23 = arith.constant 0 : index
    %c0_24 = arith.constant 0 : index
    %53 = vector.load %arg4[%c0_23, %c0_24] : memref<32x288xf32, #tpu.memory_space<vmem>>, vector<32x288xf32>
    %c17_i32_25 = arith.constant 17 : i32
    %54 = tpu.dynamic_rotate %52 by %c17_i32_25 dim 1 : vector<32x256xf32>, i32 -> vector<32x256xf32>
    %55 = vector.broadcast %6 : vector<1x256xf32> to vector<32x256xf32>
    %56 = arith.mulf %54, %55 : vector<32x256xf32>
    %c16_i32_26 = arith.constant 16 : i32
    %57 = tpu.dynamic_rotate %52 by %c16_i32_26 dim 1 : vector<32x256xf32>, i32 -> vector<32x256xf32>
    %58 = vector.broadcast %7 : vector<1x256xf32> to vector<32x256xf32>
    %59 = arith.mulf %57, %58 : vector<32x256xf32>
    %c15_i32_27 = arith.constant 15 : i32
    %60 = tpu.dynamic_rotate %52 by %c15_i32_27 dim 1 : vector<32x256xf32>, i32 -> vector<32x256xf32>
    %61 = vector.broadcast %8 : vector<1x256xf32> to vector<32x256xf32>
    %62 = arith.mulf %60, %61 : vector<32x256xf32>
    %c1_i32_28 = arith.constant 1 : i32
    %63 = tpu.dynamic_rotate %52 by %c1_i32_28 dim 1 : vector<32x256xf32>, i32 -> vector<32x256xf32>
    %64 = vector.broadcast %9 : vector<1x256xf32> to vector<32x256xf32>
    %65 = arith.mulf %63, %64 : vector<32x256xf32>
    %c255_i32_29 = arith.constant 255 : i32
    %66 = tpu.dynamic_rotate %52 by %c255_i32_29 dim 1 : vector<32x256xf32>, i32 -> vector<32x256xf32>
    %67 = vector.broadcast %10 : vector<1x256xf32> to vector<32x256xf32>
    %68 = arith.mulf %66, %67 : vector<32x256xf32>
    %c241_i32_30 = arith.constant 241 : i32
    %69 = tpu.dynamic_rotate %52 by %c241_i32_30 dim 1 : vector<32x256xf32>, i32 -> vector<32x256xf32>
    %70 = vector.broadcast %11 : vector<1x256xf32> to vector<32x256xf32>
    %71 = arith.mulf %69, %70 : vector<32x256xf32>
    %c240_i32_31 = arith.constant 240 : i32
    %72 = tpu.dynamic_rotate %52 by %c240_i32_31 dim 1 : vector<32x256xf32>, i32 -> vector<32x256xf32>
    %73 = vector.broadcast %12 : vector<1x256xf32> to vector<32x256xf32>
    %74 = arith.mulf %72, %73 : vector<32x256xf32>
    %c239_i32_32 = arith.constant 239 : i32
    %75 = tpu.dynamic_rotate %52 by %c239_i32_32 dim 1 : vector<32x256xf32>, i32 -> vector<32x256xf32>
    %76 = vector.broadcast %13 : vector<1x256xf32> to vector<32x256xf32>
    %77 = arith.mulf %75, %76 : vector<32x256xf32>
    %78 = tpu.concatenate %56, %59, %62, %65, %52, %68, %71, %74, %77 in 0 : vector<32x256xf32>, vector<32x256xf32>, vector<32x256xf32>, vector<32x256xf32>, vector<32x256xf32>, vector<32x256xf32>, vector<32x256xf32>, vector<32x256xf32>, vector<32x256xf32> -> vector<288x256xf32>
    %cst_33 = arith.constant dense<0.000000e+00> : vector<32x256xf32>
    %79 = tpu.matmul %53, %78, %cst_33 {dimension_numbers = #tpu.dot_dimension_numbers<[1], [0], [0], [1], [0, 0, 1, 1], [], []>} : vector<32x288xf32>, vector<288x256xf32>, vector<32x256xf32> -> vector<32x256xf32>
    %80 = arith.addf %79, %1 : vector<32x256xf32>
    %c0_34 = arith.constant 0 : index
    %c0_35 = arith.constant 0 : index
    %c0_36 = arith.constant 0 : index
    %81 = vector.load %arg6[%c0_34, %c0_35, %c0_36] : memref<1x32x256xf32, #tpu.memory_space<vmem>>, vector<1x32x256xf32>
    %82 = vector.shape_cast %81 : vector<1x32x256xf32> to vector<32x256xf32>
    %83 = vector.shape_cast %80 : vector<32x256xf32> to vector<1x32x256xf32>
    tpu.vector_store %arg6[%c0_34, %c0_35, %c0_36], %83 {strides = array<i32>} : memref<1x32x256xf32, #tpu.memory_space<vmem>>, vector<1x32x256xf32>,
    return
  }
  func.func @transform_0(%arg0: i32) -> (i32, i32, i32) {
    %c0_i32 = arith.constant 0 : i32
    %c0_i32_0 = arith.constant 0 : i32
    %c0_i32_1 = arith.constant 0 : i32
    return %arg0, %c0_i32, %c0_i32_0 : i32, i32, i32
  }
  func.func @transform_1(%arg0: i32) -> (i32, i32) {
    %c0_i32 = arith.constant 0 : i32
    %c0_i32_0 = arith.constant 0 : i32
    %c0_i32_1 = arith.constant 0 : i32
    return %c0_i32, %c0_i32_0 : i32, i32
  }
  func.func @transform_2(%arg0: i32) -> (i32, i32) {
    %c0_i32 = arith.constant 0 : i32
    %c0_i32_0 = arith.constant 0 : i32
    %c0_i32_1 = arith.constant 0 : i32
    return %c0_i32, %c0_i32_0 : i32, i32
  }
  func.func @transform_3(%arg0: i32) -> (i32, i32) {
    %c0_i32 = arith.constant 0 : i32
    %c0_i32_0 = arith.constant 0 : i32
    %c0_i32_1 = arith.constant 0 : i32
    return %c0_i32, %c0_i32_0 : i32, i32
  }
  func.func @transform_4(%arg0: i32) -> (i32, i32) {
    %c0_i32 = arith.constant 0 : i32
    %c0_i32_0 = arith.constant 0 : i32
    %c0_i32_1 = arith.constant 0 : i32
    return %c0_i32, %c0_i32_0 : i32, i32
  }
  func.func @transform_5(%arg0: i32) -> (i32, i32, i32) {
    %c0_i32 = arith.constant 0 : i32
    %c0_i32_0 = arith.constant 0 : i32
    %c0_i32_1 = arith.constant 0 : i32
    return %arg0, %c0_i32, %c0_i32_0 : i32, i32, i32
  }
}

</mosaic_0001>

<llo_original>
// kernel: tpu_custom_call.1
$region0: #{tpu_custom_call.1}
  #allocation0 [shape = 'u32[]', space=smem, size = 0x4, offset = 0x4, fixed_abs, tag = 'smem constant byte address 0x4 - core index']
  #allocation1 [shape = 'u32[144,128]{1,0:T(1,128)}', space=vmem, size = 0x12000, scoped, tag = 'internal scratch']
  %s0 = inlined_call_operand.hbm [shape: f32[2,32,256], index: 0, kind: input, shape index: {}]
  %s1 = inlined_call_operand.vmem [shape: f32[9,256], index: 1, kind: input, shape index: {}]
  %s2 = inlined_call_operand.hbm [shape: f32[32,288], index: 2, kind: input, shape index: {}]
  %s3 = inlined_call_operand.hbm [shape: f32[32,288], index: 3, kind: input, shape index: {}]
  %s4 = inlined_call_operand.vmem [shape: f32[32,4], index: 4, kind: input, shape index: {}]
  %s5 = inlined_call_operand.hbm [shape: f32[2,32,256], index: 5, kind: output, shape index: {}]
  %s6 = sld [smem:[#allocation0]]
  $region65: #{tpu_custom_call.1} parent=0
    _
  %s8 = ssub.s32 1, %s6
  %s9 = scalar_select 0, %s8, %s6
  $region1: #{tpu_custom_call.1} parent=0
    #allocation2 [shape = 'u8[65536]{0}', space=vmem, size = 0x10000, scoped, tag = 'input window, operand 0']
    #allocation3 [shape = 's32[2]{0}', space=sflag, size = 0x8, scoped, tag = 'scoped memory for tpu_custom_call.1']
    #allocation4 [shape = 's32[2]{0}', space=sflag, size = 0x8, scoped, tag = 'scoped memory for tpu_custom_call.1']
    #allocation5 [shape = 'u8[49152]{0}', space=vmem, size = 0xc000, scoped, tag = 'input window, operand 2, single buffered']
    #allocation6 [shape = 's32[1]{0}', space=sflag, size = 0x4, scoped, tag = 'scoped memory for tpu_custom_call.1']
    #allocation7 [shape = 'u8[49152]{0}', space=vmem, size = 0xc000, scoped, tag = 'input window, operand 3, single buffered']
    #allocation8 [shape = 'u8[65536]{0}', space=vmem, size = 0x10000, scoped, tag = 'output window, operand 0']
    %10 = vsyncpa [#allocation3], 0
    %s11 = scalar_lea.sflag [#allocation3], 1
    %12 = vsyncpa %s11, 0
    %13 = vsyncpa [#allocation6], 0
    %14 = vsyncpa [#allocation4], 0
    %s15 = scalar_lea.sflag [#allocation4], 1
    %16 = vsyncpa %s15, 0
    loop: start=0, step=1, limit=4
    $region2: #{tpu_custom_call.1} parent=1 // loop_pre_header
      _
    $region3: #{tpu_custom_call.1} parent=1 // loop_header
      %s18 = sphi 0, %s22
      %p19 = scmp.ge.s32.totalorder %s18, 4
      %s28 = sphi 0, %s30
      %s31 = sphi 0, %s28
      %s32 = sphi 0, %s31
      %s48 = sphi 0, %s32
      %s52 = sphi 0, %s52
      %s54 = sphi 0, %s52
      %s55 = sphi 0, %s54
      %s69 = sphi 0, %s55
      %s73 = sphi 0, %s73
      %s75 = sphi 0, %s73
      %s76 = sphi 0, %s75
      %s90 = sphi 0, %s76
      %s94 = sphi 0, %s94
      %s96 = sphi 0, %s94
      %s97 = sphi 0, %s96
      %s111 = sphi 0, %s97
      %s115 = sphi 0, %s115
      %s117 = sphi 0, %s115
      %s118 = sphi 0, %s117
      %s132 = sphi 0, %s118
      %s138 = sphi 0, %s140
      %s141 = sphi 0, %s138
      %s142 = sphi 0, %s141
      %s158 = sphi 0, %s142
    $region4: #{tpu_custom_call.1} parent=1 // loop_header_branch
      %21 = sbr.rel (%p19) target = $region8
    $region5: #{tpu_custom_call.1} parent=1 // loop_body
      %s23 = ssub.s32 %s18, 1
      %s24 = ssub.s32 %s18, 2
      %s25 = sadd.s32 %s18, 1
      %s26 = ssub.s32 %s18, %s25
      %p27 = scmp.eq.s32.totalorder %s26, 0
      %s29 = sadd.s32 %s28, 1
      %s30 = scalar_select %p27, %s28, %s29
      %p33 = pneg %p27
      %p34 = scmp.eq.s32.totalorder %s18, 1
      %p35 = por %p33, %p34
      %p36 = scmp.ne.s32.totalorder %s28, %s31
      %p37 = scmp.eq.s32.totalorder %s18, 0
      %p38 = por %p36, %p37
      %p39 = scmp.ne.s32.totalorder %s28, %s31
      %p40 = scmp.eq.s32.totalorder %s23, 1
      %p41 = por %p39, %p40
      %p42 = scmp.ne.s32.totalorder %s31, %s32
      %p43 = scmp.eq.s32.totalorder %s23, 0
      %p44 = por %p42, %p43
      %p45 = scmp.ne.s32.totalorder %s31, %s32
      %p46 = scmp.eq.s32.totalorder %s24, 1
      %p47 = por %p45, %p46
      %p49 = scmp.ne.s32.totalorder %s32, %s48
      %p50 = scmp.eq.s32.totalorder %s24, 0
      %p51 = por %p49, %p50
      %s53 = sadd.s32 %s52, 1
      %p56 = scmp.eq.s32.totalorder %s18, 1
      %p57 = scmp.ne.s32.totalorder %s52, %s54
      %p58 = scmp.eq.s32.totalorder %s18, 0
      %p59 = por %p57, %p58
      %p60 = scmp.ne.s32.totalorder %s52, %s54
      %p61 = scmp.eq.s32.totalorder %s23, 1
      %p62 = por %p60, %p61
      %p63 = scmp.ne.s32.totalorder %s54, %s55
      %p64 = scmp.eq.s32.totalorder %s23, 0
      %p65 = por %p63, %p64
      %p66 = scmp.ne.s32.totalorder %s54, %s55
      %p67 = scmp.eq.s32.totalorder %s24, 1
      %p68 = por %p66, %p67
      %p70 = scmp.ne.s32.totalorder %s55, %s69
      %p71 = scmp.eq.s32.totalorder %s24, 0
      %p72 = por %p70, %p71
      %s74 = sadd.s32 %s73, 1
      %p77 = scmp.eq.s32.totalorder %s18, 1
      %p78 = scmp.ne.s32.totalorder %s73, %s75
      %p79 = scmp.eq.s32.totalorder %s18, 0
      %p80 = por %p78, %p79
      %p81 = scmp.ne.s32.totalorder %s73, %s75
      %p82 = scmp.eq.s32.totalorder %s23, 1
      %p83 = por %p81, %p82
      %p84 = scmp.ne.s32.totalorder %s75, %s76
      %p85 = scmp.eq.s32.totalorder %s23, 0
      %p86 = por %p84, %p85
      %p87 = scmp.ne.s32.totalorder %s75, %s76
      %p88 = scmp.eq.s32.totalorder %s24, 1
      %p89 = por %p87, %p88
      %p91 = scmp.ne.s32.totalorder %s76, %s90
      %p92 = scmp.eq.s32.totalorder %s24, 0
      %p93 = por %p91, %p92
      %s95 = sadd.s32 %s94, 1
      %p98 = scmp.eq.s32.totalorder %s18, 1
      %p99 = scmp.ne.s32.totalorder %s94, %s96
      %p100 = scmp.eq.s32.totalorder %s18, 0
      %p101 = por %p99, %p100
      %p102 = scmp.ne.s32.totalorder %s94, %s96
      %p103 = scmp.eq.s32.totalorder %s23, 1
      %p104 = por %p102, %p103
      %p105 = scmp.ne.s32.totalorder %s96, %s97
      %p106 = scmp.eq.s32.totalorder %s23, 0
      %p107 = por %p105, %p106
      %p108 = scmp.ne.s32.totalorder %s96, %s97
      %p109 = scmp.eq.s32.totalorder %s24, 1
      %p110 = por %p108, %p109
      %p112 = scmp.ne.s32.totalorder %s97, %s111
      %p113 = scmp.eq.s32.totalorder %s24, 0
      %p114 = por %p112, %p113
      %s116 = sadd.s32 %s115, 1
      %p119 = scmp.eq.s32.totalorder %s18, 1
      %p120 = scmp.ne.s32.totalorder %s115, %s117
      %p121 = scmp.eq.s32.totalorder %s18, 0
      %p122 = por %p120, %p121
      %p123 = scmp.ne.s32.totalorder %s115, %s117
      %p124 = scmp.eq.s32.totalorder %s23, 1
      %p125 = por %p123, %p124
      %p126 = scmp.ne.s32.totalorder %s117, %s118
      %p127 = scmp.eq.s32.totalorder %s23, 0
      %p128 = por %p126, %p127
      %p129 = scmp.ne.s32.totalorder %s117, %s118
      %p130 = scmp.eq.s32.totalorder %s24, 1
      %p131 = por %p129, %p130
      %p133 = scmp.ne.s32.totalorder %s118, %s132
      %p134 = scmp.eq.s32.totalorder %s24, 0
      %p135 = por %p133, %p134
      %s136 = ssub.s32 %s18, %s25
      %p137 = scmp.eq.s32.totalorder %s136, 0
      %s139 = sadd.s32 %s138, 1
      %s140 = scalar_select %p137, %s138, %s139
      %p143 = pneg %p137
      %p144 = scmp.eq.s32.totalorder %s18, 1
      %p145 = por %p143, %p144
      %p146 = scmp.ne.s32.totalorder %s138, %s141
      %p147 = scmp.eq.s32.totalorder %s18, 0
      %p148 = por %p146, %p147
      %p149 = scmp.ne.s32.totalorder %s138, %s141
      %p150 = scmp.eq.s32.totalorder %s23, 1
      %p151 = por %p149, %p150
      %p152 = scmp.ne.s32.totalorder %s141, %s142
      %p153 = scmp.eq.s32.totalorder %s23, 0
      %p154 = por %p152, %p153
      %p155 = scmp.ne.s32.totalorder %s141, %s142
      %p156 = scmp.eq.s32.totalorder %s24, 1
      %p157 = por %p155, %p156
      %p159 = scmp.ne.s32.totalorder %s142, %s158
      %p160 = scmp.eq.s32.totalorder %s24, 0
      %p161 = por %p159, %p160
      %p162 = scmp.le.s32.totalorder 1, %s18
      %p163 = scmp.lt.s32.totalorder %s18, 3
      %p164 = pnand %p162, %p163
      %p165 = pneg %p164
      // Predicated region
      $region9: #{tpu_custom_call.1} parent=5 // pred_check
        _
      $region10: #{tpu_custom_call.1} parent=5 // pred_check_branch
        %167 = sbr.rel (%p164) target = $region12
      $region11: #{tpu_custom_call.1} parent=5 // pred_region
        %s168 = ssub.s32 %s18, 1
        // Predicated region
        $region13: #{tpu_custom_call.1} parent=11 // pred_check
          %p169 = pneg %p65
        $region14: #{tpu_custom_call.1} parent=11 // pred_check_branch
          %171 = sbr.rel (%p169) target = $region16
        $region15: #{tpu_custom_call.1} parent=11 // pred_region
          _
        $region16: #{tpu_custom_call.1} parent=11 // pred_fallthru
          _
        // Predicated region
        $region17: #{tpu_custom_call.1} parent=11 // pred_check
          %p172 = pneg %p86
        $region18: #{tpu_custom_call.1} parent=11 // pred_check_branch
          %174 = sbr.rel (%p172) target = $region20
        $region19: #{tpu_custom_call.1} parent=11 // pred_region
          %s176 = ssub.s32 1536, 1536
          %177 = vsyncadd [#allocation6], %s176
          %s178 = sshll.u32 [#allocation5], 4
          %s179 = int_to_ptr.vmem [resolvable:$true] %s178
          %184 = dma.hbm_to_vmem [thread:$0]  %s2, 1536, %s179, [#allocation6], 384, 384, 24
        $region20: #{tpu_custom_call.1} parent=11 // pred_fallthru
          _
        // Predicated region
        $region21: #{tpu_custom_call.1} parent=11 // pred_check
          %p185 = pneg %p107
        $region22: #{tpu_custom_call.1} parent=11 // pred_check_branch
          %187 = sbr.rel (%p185) target = $region24
        $region23: #{tpu_custom_call.1} parent=11 // pred_region
          %s189 = ssub.s32 1536, 1536
          %190 = vsyncadd [#allocation6], %s189
          %s191 = sshll.u32 [#allocation7], 4
          %s192 = int_to_ptr.vmem [resolvable:$true] %s191
          %197 = dma.hbm_to_vmem [thread:$0]  %s3, 1536, %s192, [#allocation6], 384, 384, 24
        $region24: #{tpu_custom_call.1} parent=11 // pred_fallthru
          _
        // Predicated region
        $region25: #{tpu_custom_call.1} parent=11 // pred_check
          %p198 = pneg %p128
        $region26: #{tpu_custom_call.1} parent=11 // pred_check_branch
          %200 = sbr.rel (%p198) target = $region28
        $region27: #{tpu_custom_call.1} parent=11 // pred_region
          _
        $region28: #{tpu_custom_call.1} parent=11 // pred_fallthru
          _
      $region12: #{tpu_custom_call.1} parent=5 // pred_fallthru
        _
      %p201 = scmp.lt.s32.totalorder %s18, 2
      // Predicated region
      $region29: #{tpu_custom_call.1} parent=5 // pred_check
        %p202 = pneg %p201
      $region30: #{tpu_custom_call.1} parent=5 // pred_check_branch
        %204 = sbr.rel (%p202) target = $region32
      $region31: #{tpu_custom_call.1} parent=5 // pred_region
        // Predicated region
        $region33: #{tpu_custom_call.1} parent=31 // pred_check
          %p205 = pneg %p38
        $region34: #{tpu_custom_call.1} parent=31 // pred_check_branch
          %207 = sbr.rel (%p205) target = $region36
        $region35: #{tpu_custom_call.1} parent=31 // pred_region
          %s208 = sand.u32 %s28, 1
          %s209 = scalar_lea.sflag [#allocation3], %s208
          %s210 = sand.u32 %s28, 1
          %s211 = smul.addr %s210, 64
          %s212 = scalar_lea.vmem [#allocation2], %s211
          %s214 = ssub.s32 1024, 1024
          %215 = vsyncadd %s209, %s214
          %s216 = smul.addr %s18, 8
          %s217 = smul.addr %s216, 128
          %s218 = scalar_lea.hbm %s0, %s217
          %s219 = sshll.u32 %s212, 4
          %s220 = int_to_ptr.vmem [resolvable:$true] %s219
          %225 = dma.hbm_to_vmem [thread:$0]  %s218, 1024, %s220, %s209, 256, 256, 16
        $region36: #{tpu_custom_call.1} parent=31 // pred_fallthru
          _
      $region32: #{tpu_custom_call.1} parent=5 // pred_fallthru
        _
      %p226 = scmp.le.s32.totalorder 1, %s18
      %p227 = scmp.lt.s32.totalorder %s18, 3
      %p228 = pnand %p226, %p227
      %p229 = pneg %p228
      // Predicated region
      $region37: #{tpu_custom_call.1} parent=5 // pred_check
        _
      $region38: #{tpu_custom_call.1} parent=5 // pred_check_branch
        %231 = sbr.rel (%p228) target = $region40
      $region39: #{tpu_custom_call.1} parent=5 // pred_region
        %s232 = ssub.s32 %s18, 1
        %s233 = sand.u32 %s31, 1
        %s234 = scalar_lea.sflag [#allocation3], %s233
        %s235 = sand.u32 %s31, 1
        %s236 = smul.addr %s235, 64
        %s237 = scalar_lea.vmem [#allocation2], %s236
        // Predicated region
        $region41: #{tpu_custom_call.1} parent=39 // pred_check
          %p238 = pneg %p44
        $region42: #{tpu_custom_call.1} parent=39 // pred_check_branch
          %240 = sbr.rel (%p238) target = $region44
        $region43: #{tpu_custom_call.1} parent=39 // pred_region
          %241 = dma.done %s234, 1024
        $region44: #{tpu_custom_call.1} parent=39 // pred_fallthru
          _
        // Predicated region
        $region45: #{tpu_custom_call.1} parent=39 // pred_check
          %p242 = pneg %p86
        $region46: #{tpu_custom_call.1} parent=39 // pred_check_branch
          %244 = sbr.rel (%p242) target = $region48
        $region47: #{tpu_custom_call.1} parent=39 // pred_region
          %245 = dma.done [#allocation6], 1536
        $region48: #{tpu_custom_call.1} parent=39 // pred_fallthru
          _
        // Predicated region
        $region49: #{tpu_custom_call.1} parent=39 // pred_check
          %p246 = pneg %p107
        $region50: #{tpu_custom_call.1} parent=39 // pred_check_branch
          %248 = sbr.rel (%p246) target = $region52
        $region51: #{tpu_custom_call.1} parent=39 // pred_region
          %249 = dma.done [#allocation6], 1536
        $region52: #{tpu_custom_call.1} parent=39 // pred_fallthru
          _
        %s250 = sand.u32 %s31, 1
        %s251 = scalar_lea.sflag [#allocation3], %s250
        %s252 = sand.u32 %s31, 1
        %s253 = smul.addr %s252, 64
        %s254 = scalar_lea.vmem [#allocation2], %s253
        %p255 = pneg %p44
        %p256 = pneg %p41
        %p257 = pneg %p65
        %p258 = pneg %p62
        %p259 = pneg %p86
        %p260 = pneg %p83
        %p261 = pneg %p107
        %p262 = pneg %p104
        %p263 = pneg %p128
        %p264 = pneg %p125
        %p265 = pneg %p154
        %p266 = pneg %p151
        %s267 = sand.u32 %s141, 1
        %s268 = scalar_lea.sflag [#allocation4], %s267
        %s269 = sand.u32 %s141, 1
        %s270 = smul.addr %s269, 64
        %s271 = scalar_lea.vmem [#allocation8], %s270
        %v272 = vld [vmem:[%s237] sm:$0xff]
        %v273 = vld [vmem:[%s237 + $0x8] sm:$0xff]
        %v274 = vld [vmem:[%s237 + $0x10] sm:$0xff]
        %v275 = vld [vmem:[%s237 + $0x18] sm:$0xff]
        %v276 = vld [vmem:[%s237 + $0x20] sm:$0xff]
        %v277 = vld [vmem:[%s237 + $0x28] sm:$0xff]
        %v278 = vld [vmem:[%s237 + $0x30] sm:$0xff]
        %v279 = vld [vmem:[%s237 + $0x38] sm:$0xff]
        %v280 = vld [vmem:[%s4] sm:$0xff]
        %v281 = vld [vmem:[%s4 + $0x8] sm:$0xff]
        %v282 = vld [vmem:[%s4 + $0x10] sm:$0xff]
        %v283 = vld [vmem:[%s4 + $0x18] sm:$0xff]
        %v284 = vld [vmem:[%s1] ss:$8 sm:$0x3]
        %s285 = scalar_lea.vmem %s1, 1
        %v286 = vld [vmem:[%s285] ss:$8 sm:$0x3]
        %s287 = scalar_lea.vmem %s1, 2
        %v288 = vld [vmem:[%s287] ss:$8 sm:$0x3]
        %s289 = scalar_lea.vmem %s1, 3
        %v290 = vld [vmem:[%s289] ss:$8 sm:$0x3]
        %s291 = scalar_lea.vmem %s1, 5
        %v292 = vld [vmem:[%s291] ss:$8 sm:$0x3]
        %s293 = scalar_lea.vmem %s1, 6
        %v294 = vld [vmem:[%s293] ss:$8 sm:$0x3]
        %s295 = scalar_lea.vmem %s1, 7
        %v296 = vld [vmem:[%s295] ss:$8 sm:$0x3]
        %s297 = scalar_lea.vmem %s1, 16
        %v298 = vld [vmem:[%s297] ss:$8 sm:$0x3]
        %300 = vset.pattern.permute.xlu0 0
        %301 = vperm.xlu0 %300, %v280
        %v302 = vpop.permute.xlu0 %301
        %305 = vset.pattern.permute.xlu0 0
        %306 = vperm.xlu0 %305, %v281
        %v307 = vpop.permute.xlu0 %306
        %310 = vset.pattern.permute.xlu0 0
        %311 = vperm.xlu0 %310, %v282
        %v312 = vpop.permute.xlu0 %311
        %315 = vset.pattern.permute.xlu0 0
        %316 = vperm.xlu0 %315, %v283
        %v317 = vpop.permute.xlu0 %316
        %v319 = vmul.f32 %v272, %v302
        %v320 = vmul.f32 %v273, %v302
        %v321 = vmul.f32 %v274, %v307
        %v322 = vmul.f32 %v275, %v307
        %v323 = vmul.f32 %v276, %v312
        %v324 = vmul.f32 %v277, %v312
        %v325 = vmul.f32 %v278, %v317
        %v326 = vmul.f32 %v279, %v317
        %327 = vset.pattern.permute.xlu0 1
        %328 = vperm.xlu0 %327, %v280
        %v329 = vpop.permute.xlu0 %328
        %331 = vset.pattern.permute.xlu0 1
        %332 = vperm.xlu0 %331, %v281
        %v333 = vpop.permute.xlu0 %332
        %335 = vset.pattern.permute.xlu0 1
        %336 = vperm.xlu0 %335, %v282
        %v337 = vpop.permute.xlu0 %336
        %339 = vset.pattern.permute.xlu0 1
        %340 = vperm.xlu0 %339, %v283
        %v341 = vpop.permute.xlu0 %340
        %v343 = vadd.f32 %v319, %v329
        %v344 = vadd.f32 %v320, %v329
        %v345 = vadd.f32 %v321, %v333
        %v346 = vadd.f32 %v322, %v333
        %v347 = vadd.f32 %v323, %v337
        %v348 = vadd.f32 %v324, %v337
        %v349 = vadd.f32 %v325, %v341
        %v350 = vadd.f32 %v326, %v341
        %v351 = vmax.f32 %v343, 0.0
        %v352 = vmax.f32 %v344, 0.0
        %v353 = vmax.f32 %v345, 0.0
        %v354 = vmax.f32 %v346, 0.0
        %v355 = vmax.f32 %v347, 0.0
        %v356 = vmax.f32 %v348, 0.0
        %v357 = vmax.f32 %v349, 0.0
        %v358 = vmax.f32 %v350, 0.0
        %v359 = vld [vmem:[#allocation5] sm:$0xff]
        %v360 = vld [vmem:[#allocation5 + $0x8] sm:$0xff]
        %v361 = vld [vmem:[#allocation5 + $0x10] sm:$0xff]
        %v362 = vld [vmem:[#allocation5 + $0x18] sm:$0xff]
        %v363 = vld [vmem:[#allocation5 + $0x20] sm:$0xff]
        %v364 = vld [vmem:[#allocation5 + $0x28] sm:$0xff]
        %v365 = vld [vmem:[#allocation5 + $0x30] sm:$0xff]
        %v366 = vld [vmem:[#allocation5 + $0x38] sm:$0xff]
        %v367 = vld [vmem:[#allocation5 + $0x40] sm:$0xff]
        %v368 = vld [vmem:[#allocation5 + $0x48] sm:$0xff]
        %v369 = vld [vmem:[#allocation5 + $0x50] sm:$0xff]
        %v370 = vld [vmem:[#allocation5 + $0x58] sm:$0xff]
        %371 = vrot.lane.b32.xlu0 %v351, 17
        %v372 = vpop.permute.xlu0 %371
        %373 = vrot.lane.b32.xlu0 %v353, 17
        %v374 = vpop.permute.xlu0 %373
        %375 = vrot.lane.b32.xlu0 %v355, 17
        %v376 = vpop.permute.xlu0 %375
        %377 = vrot.lane.b32.xlu0 %v357, 17
        %v378 = vpop.permute.xlu0 %377
        %379 = vrot.lane.b32.xlu0 %v352, 17
        %v380 = vpop.permute.xlu0 %379
        %381 = vrot.lane.b32.xlu0 %v354, 17
        %v382 = vpop.permute.xlu0 %381
        %383 = vrot.lane.b32.xlu0 %v356, 17
        %v384 = vpop.permute.xlu0 %383
        %385 = vrot.lane.b32.xlu0 %v358, 17
        %v386 = vpop.permute.xlu0 %385
        %v387 = vlaneseq
        %v388 = vand.u32 %v387, 127
        %vm389 = vcmp.lt.s32.totalorder %v388, 17
        %v390 = vsel %vm389, %v372, %v380
        %v391 = vsel %vm389, %v374, %v382
        %v392 = vsel %vm389, %v376, %v384
        %v393 = vsel %vm389, %v378, %v386
        %v394 = vsel %vm389, %v380, %v372
        %v395 = vsel %vm389, %v382, %v374
        %v396 = vsel %vm389, %v384, %v376
        %v397 = vsel %vm389, %v386, %v378
        %v399 = vlaneseq
        %v400 = vshrl.u32 %v399, 7
        %v401 = vsub.s32 0, %v400
        %v402 = vrot.slane %v284, %v401
        %v403 = vlaneseq
        %v404 = vshrl.u32 %v403, 7
        %v405 = vsub.s32 1, %v404
        %v406 = vrot.slane %v284, %v405
        %v409 = vmul.f32 %v394, %v402
        %v410 = vmul.f32 %v390, %v406
        %v411 = vmul.f32 %v395, %v402
        %v412 = vmul.f32 %v391, %v406
        %v413 = vmul.f32 %v396, %v402
        %v414 = vmul.f32 %v392, %v406
        %v415 = vmul.f32 %v397, %v402
        %v416 = vmul.f32 %v393, %v406
        %417 = vrot.lane.b32.xlu0 %v351, 16
        %v418 = vpop.permute.xlu0 %417
        %419 = vrot.lane.b32.xlu0 %v353, 16
        %v420 = vpop.permute.xlu0 %419
        %421 = vrot.lane.b32.xlu0 %v355, 16
        %v422 = vpop.permute.xlu0 %421
        %423 = vrot.lane.b32.xlu0 %v357, 16
        %v424 = vpop.permute.xlu0 %423
        %425 = vrot.lane.b32.xlu0 %v352, 16
        %v426 = vpop.permute.xlu0 %425
        %427 = vrot.lane.b32.xlu0 %v354, 16
        %v428 = vpop.permute.xlu0 %427
        %429 = vrot.lane.b32.xlu0 %v356, 16
        %v430 = vpop.permute.xlu0 %429
        %431 = vrot.lane.b32.xlu0 %v358, 16
        %v432 = vpop.permute.xlu0 %431
        %vm433 = vcmp.lt.s32.totalorder %v388, 16
        %v434 = vsel %vm433, %v418, %v426
        %v435 = vsel %vm433, %v420, %v428
        %v436 = vsel %vm433, %v422, %v430
        %v437 = vsel %vm433, %v424, %v432
        %v438 = vsel %vm433, %v426, %v418
        %v439 = vsel %vm433, %v428, %v420
        %v440 = vsel %vm433, %v430, %v422
        %v441 = vsel %vm433, %v432, %v424
        %v443 = vlaneseq
        %v444 = vshrl.u32 %v443, 7
        %v445 = vsub.s32 0, %v444
        %v446 = vrot.slane %v286, %v445
        %v447 = vlaneseq
        %v448 = vshrl.u32 %v447, 7
        %v449 = vsub.s32 1, %v448
        %v450 = vrot.slane %v286, %v449
        %v453 = vmul.f32 %v438, %v446
        %v454 = vmul.f32 %v434, %v450
        %v455 = vmul.f32 %v439, %v446
        %v456 = vmul.f32 %v435, %v450
        %v457 = vmul.f32 %v440, %v446
        %v458 = vmul.f32 %v436, %v450
        %v459 = vmul.f32 %v441, %v446
        %v460 = vmul.f32 %v437, %v450
        %461 = vrot.lane.b32.xlu0 %v351, 15
        %v462 = vpop.permute.xlu0 %461
        %463 = vrot.lane.b32.xlu0 %v353, 15
        %v464 = vpop.permute.xlu0 %463
        %465 = vrot.lane.b32.xlu0 %v355, 15
        %v466 = vpop.permute.xlu0 %465
        %467 = vrot.lane.b32.xlu0 %v357, 15
        %v468 = vpop.permute.xlu0 %467
        %469 = vrot.lane.b32.xlu0 %v352, 15
        %v470 = vpop.permute.xlu0 %469
        %471 = vrot.lane.b32.xlu0 %v354, 15
        %v472 = vpop.permute.xlu0 %471
        %473 = vrot.lane.b32.xlu0 %v356, 15
        %v474 = vpop.permute.xlu0 %473
        %475 = vrot.lane.b32.xlu0 %v358, 15
        %v476 = vpop.permute.xlu0 %475
        %vm477 = vcmp.lt.s32.totalorder %v388, 15
        %v478 = vsel %vm477, %v462, %v470
        %v479 = vsel %vm477, %v464, %v472
        %v480 = vsel %vm477, %v466, %v474
        %v481 = vsel %vm477, %v468, %v476
        %v482 = vsel %vm477, %v470, %v462
        %v483 = vsel %vm477, %v472, %v464
        %v484 = vsel %vm477, %v474, %v466
        %v485 = vsel %vm477, %v476, %v468
        %v487 = vlaneseq
        %v488 = vshrl.u32 %v487, 7
        %v489 = vsub.s32 0, %v488
        %v490 = vrot.slane %v288, %v489
        %v491 = vlaneseq
        %v492 = vshrl.u32 %v491, 7
        %v493 = vsub.s32 1, %v492
        %v494 = vrot.slane %v288, %v493
        %v497 = vmul.f32 %v482, %v490
        %v498 = vmul.f32 %v478, %v494
        %v499 = vmul.f32 %v483, %v490
        %v500 = vmul.f32 %v479, %v494
        %v501 = vmul.f32 %v484, %v490
        %v502 = vmul.f32 %v480, %v494
        %v503 = vmul.f32 %v485, %v490
        %v504 = vmul.f32 %v481, %v494
        %505 = vrot.lane.b32.xlu0 %v351, 1
        %v506 = vpop.permute.xlu0 %505
        %507 = vrot.lane.b32.xlu0 %v353, 1
        %v508 = vpop.permute.xlu0 %507
        %509 = vrot.lane.b32.xlu0 %v355, 1
        %v510 = vpop.permute.xlu0 %509
        %511 = vrot.lane.b32.xlu0 %v357, 1
        %v512 = vpop.permute.xlu0 %511
        %513 = vrot.lane.b32.xlu0 %v352, 1
        %v514 = vpop.permute.xlu0 %513
        %515 = vrot.lane.b32.xlu0 %v354, 1
        %v516 = vpop.permute.xlu0 %515
        %517 = vrot.lane.b32.xlu0 %v356, 1
        %v518 = vpop.permute.xlu0 %517
        %519 = vrot.lane.b32.xlu0 %v358, 1
        %v520 = vpop.permute.xlu0 %519
        %vm521 = vcmp.lt.s32.totalorder %v388, 1
        %v522 = vsel %vm521, %v506, %v514
        %v523 = vsel %vm521, %v508, %v516
        %v524 = vsel %vm521, %v510, %v518
        %v525 = vsel %vm521, %v512, %v520
        %v526 = vsel %vm521, %v514, %v506
        %v527 = vsel %vm521, %v516, %v508
        %v528 = vsel %vm521, %v518, %v510
        %v529 = vsel %vm521, %v520, %v512
        %v531 = vlaneseq
        %v532 = vshrl.u32 %v531, 7
        %v533 = vsub.s32 0, %v532
        %v534 = vrot.slane %v290, %v533
        %v535 = vlaneseq
        %v536 = vshrl.u32 %v535, 7
        %v537 = vsub.s32 1, %v536
        %v538 = vrot.slane %v290, %v537
        %v541 = vmul.f32 %v526, %v534
        %v542 = vmul.f32 %v522, %v538
        %v543 = vmul.f32 %v527, %v534
        %v544 = vmul.f32 %v523, %v538
        %v545 = vmul.f32 %v528, %v534
        %v546 = vmul.f32 %v524, %v538
        %v547 = vmul.f32 %v529, %v534
        %v548 = vmul.f32 %v525, %v538
        %549 = vrot.lane.b32.xlu0 %v351, 127
        %v550 = vpop.permute.xlu0 %549
        %551 = vrot.lane.b32.xlu0 %v353, 127
        %v552 = vpop.permute.xlu0 %551
        %553 = vrot.lane.b32.xlu0 %v355, 127
        %v554 = vpop.permute.xlu0 %553
        %555 = vrot.lane.b32.xlu0 %v357, 127
        %v556 = vpop.permute.xlu0 %555
        %557 = vrot.lane.b32.xlu0 %v352, 127
        %v558 = vpop.permute.xlu0 %557
        %559 = vrot.lane.b32.xlu0 %v354, 127
        %v560 = vpop.permute.xlu0 %559
        %561 = vrot.lane.b32.xlu0 %v356, 127
        %v562 = vpop.permute.xlu0 %561
        %563 = vrot.lane.b32.xlu0 %v358, 127
        %v564 = vpop.permute.xlu0 %563
        %vm565 = vcmp.lt.s32.totalorder %v388, 127
        %v566 = vsel %vm565, %v550, %v558
        %v567 = vsel %vm565, %v552, %v560
        %v568 = vsel %vm565, %v554, %v562
        %v569 = vsel %vm565, %v556, %v564
        %v570 = vsel %vm565, %v558, %v550
        %v571 = vsel %vm565, %v560, %v552
        %v572 = vsel %vm565, %v562, %v554
        %v573 = vsel %vm565, %v564, %v556
        %v575 = vlaneseq
        %v576 = vshrl.u32 %v575, 7
        %v577 = vsub.s32 0, %v576
        %v578 = vrot.slane %v292, %v577
        %v579 = vlaneseq
        %v580 = vshrl.u32 %v579, 7
        %v581 = vsub.s32 1, %v580
        %v582 = vrot.slane %v292, %v581
        %v585 = vmul.f32 %v566, %v578
        %v586 = vmul.f32 %v570, %v582
        %v587 = vmul.f32 %v567, %v578
        %v588 = vmul.f32 %v571, %v582
        %v589 = vmul.f32 %v568, %v578
        %v590 = vmul.f32 %v572, %v582
        %v591 = vmul.f32 %v569, %v578
        %v592 = vmul.f32 %v573, %v582
        %593 = vrot.lane.b32.xlu0 %v351, 113
        %v594 = vpop.permute.xlu0 %593
        %595 = vrot.lane.b32.xlu0 %v353, 113
        %v596 = vpop.permute.xlu0 %595
        %597 = vrot.lane.b32.xlu0 %v355, 113
        %v598 = vpop.permute.xlu0 %597
        %599 = vrot.lane.b32.xlu0 %v357, 113
        %v600 = vpop.permute.xlu0 %599
        %601 = vrot.lane.b32.xlu0 %v352, 113
        %v602 = vpop.permute.xlu0 %601
        %603 = vrot.lane.b32.xlu0 %v354, 113
        %v604 = vpop.permute.xlu0 %603
        %605 = vrot.lane.b32.xlu0 %v356, 113
        %v606 = vpop.permute.xlu0 %605
        %607 = vrot.lane.b32.xlu0 %v358, 113
        %v608 = vpop.permute.xlu0 %607
        %vm609 = vcmp.lt.s32.totalorder %v388, 113
        %v610 = vsel %vm609, %v594, %v602
        %v611 = vsel %vm609, %v596, %v604
        %v612 = vsel %vm609, %v598, %v606
        %v613 = vsel %vm609, %v600, %v608
        %v614 = vsel %vm609, %v602, %v594
        %v615 = vsel %vm609, %v604, %v596
        %v616 = vsel %vm609, %v606, %v598
        %v617 = vsel %vm609, %v608, %v600
        %v619 = vlaneseq
        %v620 = vshrl.u32 %v619, 7
        %v621 = vsub.s32 0, %v620
        %v622 = vrot.slane %v294, %v621
        %v623 = vlaneseq
        %v624 = vshrl.u32 %v623, 7
        %v625 = vsub.s32 1, %v624
        %v626 = vrot.slane %v294, %v625
        %v629 = vmul.f32 %v610, %v622
        %v630 = vmul.f32 %v614, %v626
        %v631 = vmul.f32 %v611, %v622
        %v632 = vmul.f32 %v615, %v626
        %v633 = vmul.f32 %v612, %v622
        %v634 = vmul.f32 %v616, %v626
        %v635 = vmul.f32 %v613, %v622
        %v636 = vmul.f32 %v617, %v626
        %637 = vrot.lane.b32.xlu0 %v351, 112
        %v638 = vpop.permute.xlu0 %637
        %639 = vrot.lane.b32.xlu0 %v353, 112
        %v640 = vpop.permute.xlu0 %639
        %641 = vrot.lane.b32.xlu0 %v355, 112
        %v642 = vpop.permute.xlu0 %641
        %643 = vrot.lane.b32.xlu0 %v357, 112
        %v644 = vpop.permute.xlu0 %643
        %645 = vrot.lane.b32.xlu0 %v352, 112
        %v646 = vpop.permute.xlu0 %645
        %647 = vrot.lane.b32.xlu0 %v354, 112
        %v648 = vpop.permute.xlu0 %647
        %649 = vrot.lane.b32.xlu0 %v356, 112
        %v650 = vpop.permute.xlu0 %649
        %651 = vrot.lane.b32.xlu0 %v358, 112
        %v652 = vpop.permute.xlu0 %651
        %vm653 = vcmp.lt.s32.totalorder %v388, 112
        %v654 = vsel %vm653, %v638, %v646
        %v655 = vsel %vm653, %v640, %v648
        %v656 = vsel %vm653, %v642, %v650
        %v657 = vsel %vm653, %v644, %v652
        %v658 = vsel %vm653, %v646, %v638
        %v659 = vsel %vm653, %v648, %v640
        %v660 = vsel %vm653, %v650, %v642
        %v661 = vsel %vm653, %v652, %v644
        %v663 = vlaneseq
        %v664 = vshrl.u32 %v663, 7
        %v665 = vsub.s32 0, %v664
        %v666 = vrot.slane %v296, %v665
        %v667 = vlaneseq
        %v668 = vshrl.u32 %v667, 7
        %v669 = vsub.s32 1, %v668
        %v670 = vrot.slane %v296, %v669
        %v673 = vmul.f32 %v654, %v666
        %v674 = vmul.f32 %v658, %v670
        %v675 = vmul.f32 %v655, %v666
        %v676 = vmul.f32 %v659, %v670
        %v677 = vmul.f32 %v656, %v666
        %v678 = vmul.f32 %v660, %v670
        %v679 = vmul.f32 %v657, %v666
        %v680 = vmul.f32 %v661, %v670
        %681 = vrot.lane.b32.xlu0 %v351, 111
        %v682 = vpop.permute.xlu0 %681
        %683 = vrot.lane.b32.xlu0 %v353, 111
        %v684 = vpop.permute.xlu0 %683
        %685 = vrot.lane.b32.xlu0 %v355, 111
        %v686 = vpop.permute.xlu0 %685
        %687 = vrot.lane.b32.xlu0 %v357, 111
        %v688 = vpop.permute.xlu0 %687
        %689 = vrot.lane.b32.xlu0 %v352, 111
        %v690 = vpop.permute.xlu0 %689
        %691 = vrot.lane.b32.xlu0 %v354, 111
        %v692 = vpop.permute.xlu0 %691
        %693 = vrot.lane.b32.xlu0 %v356, 111
        %v694 = vpop.permute.xlu0 %693
        %695 = vrot.lane.b32.xlu0 %v358, 111
        %v696 = vpop.permute.xlu0 %695
        %vm697 = vcmp.lt.s32.totalorder %v388, 111
        %v698 = vsel %vm697, %v682, %v690
        %v699 = vsel %vm697, %v684, %v692
        %v700 = vsel %vm697, %v686, %v694
        %v701 = vsel %vm697, %v688, %v696
        %v702 = vsel %vm697, %v690, %v682
        %v703 = vsel %vm697, %v692, %v684
        %v704 = vsel %vm697, %v694, %v686
        %v705 = vsel %vm697, %v696, %v688
        %v707 = vlaneseq
        %v708 = vshrl.u32 %v707, 7
        %v709 = vsub.s32 0, %v708
        %v710 = vrot.slane %v298, %v709
        %v711 = vlaneseq
        %v712 = vshrl.u32 %v711, 7
        %v713 = vsub.s32 1, %v712
        %v714 = vrot.slane %v298, %v713
        %v717 = vmul.f32 %v698, %v710
        %v718 = vmul.f32 %v702, %v714
        %v719 = vmul.f32 %v699, %v710
        %v720 = vmul.f32 %v703, %v714
        %v721 = vmul.f32 %v700, %v710
        %v722 = vmul.f32 %v704, %v714
        %v723 = vmul.f32 %v701, %v710
        %v724 = vmul.f32 %v705, %v714
        %vm725 = vcmask 261120
        %v727 = vsel %vm725, %v361, 0
        %v730 = vsel %vm725, %v364, 0
        %v733 = vsel %vm725, %v367, 0
        %v736 = vsel %vm725, %v370, 0
        %738 = vmatprep.subr.mxu0 %v410
        %739 = vmatpush1.msra.mxu0 %v409
        %740 = vmatprep.subr.mxu0 %v412
        %741 = vmatpush1.msra.mxu0 %v411
        %742 = vmatprep.subr.mxu0 %v414
        %743 = vmatpush1.msra.mxu0 %v413
        %744 = vmatprep.subr.mxu0 %v416
        %745 = vmatpush1.msra.mxu0 %v415
        %746 = vmatprep.subr.mxu0 %v454
        %747 = vmatpush1.msra.mxu0 %v453
        %748 = vmatprep.subr.mxu0 %v456
        %749 = vmatpush1.msra.mxu0 %v455
        %750 = vmatprep.subr.mxu0 %v458
        %751 = vmatpush1.msra.mxu0 %v457
        %752 = vmatprep.subr.mxu0 %v460
        %753 = vmatpush1.msra.mxu0 %v459
        %754 = vmatprep.subr.mxu0 %v498
        %755 = vmatpush1.msra.mxu0 %v497
        %756 = vmatprep.subr.mxu0 %v500
        %757 = vmatpush1.msra.mxu0 %v499
        %758 = vmatprep.subr.mxu0 %v502
        %759 = vmatpush1.msra.mxu0 %v501
        %760 = vmatprep.subr.mxu0 %v504
        %761 = vmatpush1.msra.mxu0 %v503
        %762 = vmatprep.subr.mxu0 %v542
        %763 = vmatpush1.msra.mxu0 %v541
        %764 = vmatprep.subr.mxu0 %v544
        %765 = vmatpush1.msra.mxu0 %v543
        %766 = vmatprep.subr.mxu0 %v546
        %767 = vmatpush1.msra.mxu0 %v545
        %768 = vmatprep.subr.mxu0 %v548
        %769 = vmatpush1.msra.mxu0 %v547
        %770 = vmatprep.subr.mxu0 %v352
        %771 = vmatpush1.msra.mxu0 %v351
        %772 = vmatprep.subr.mxu0 %v354
        %773 = vmatpush1.msra.mxu0 %v353
        %774 = vmatprep.subr.mxu0 %v356
        %775 = vmatpush1.msra.mxu0 %v355
        %776 = vmatprep.subr.mxu0 %v358
        %777 = vmatpush1.msra.mxu0 %v357
        %778 = vmatprep.subr.mxu0 %v586
        %779 = vmatpush1.msra.mxu0 %v585
        %780 = vmatprep.subr.mxu0 %v588
        %781 = vmatpush1.msra.mxu0 %v587
        %782 = vmatprep.subr.mxu0 %v590
        %783 = vmatpush1.msra.mxu0 %v589
        %784 = vmatprep.subr.mxu0 %v592
        %785 = vmatpush1.msra.mxu0 %v591
        %786 = vmatprep.subr.mxu0 %v630
        %787 = vmatpush1.msra.mxu0 %v629
        %788 = vmatprep.subr.mxu0 %v632
        %789 = vmatpush1.msra.mxu0 %v631
        %790 = vmatprep.subr.mxu0 %v634
        %791 = vmatpush1.msra.mxu0 %v633
        %792 = vmatprep.subr.mxu0 %v636
        %793 = vmatpush1.msra.mxu0 %v635
        %794 = vmatprep.subr.mxu0 %v674
        %795 = vmatpush1.msra.mxu0 %v673
        %796 = vmatprep.subr.mxu0 %v676
        %797 = vmatpush1.msra.mxu0 %v675
        %798 = vmatprep.subr.mxu0 %v678
        %799 = vmatpush1.msra.mxu0 %v677
        %800 = vmatprep.subr.mxu0 %v680
        %801 = vmatpush1.msra.mxu0 %v679
        %802 = vmatprep.mubr.f32.mxu0 %v360
        %803 = vmatmul.mubr.f32.gmra.mrb[0].mxu0 %v359
        %v804 = vpop.f32.mrb[0].mxu0
        %v805 = vadd.f32 0.0, %v804
        %v806 = vpop.f32.mrb[0].mxu0
        %v807 = vadd.f32 0.0, %v806
        %808 = vmatprep.mubr.f32.mxu0 %v363
        %809 = vmatmul.mubr.f32.gmra.mrb[0].mxu0 %v362
        %v810 = vpop.f32.mrb[0].mxu0
        %v811 = vadd.f32 0.0, %v810
        %v812 = vpop.f32.mrb[0].mxu0
        %v813 = vadd.f32 0.0, %v812
        %814 = vmatprep.mubr.f32.mxu0 %v366
        %815 = vmatmul.mubr.f32.gmra.mrb[0].mxu0 %v365
        %v816 = vpop.f32.mrb[0].mxu0
        %v817 = vadd.f32 0.0, %v816
        %v818 = vpop.f32.mrb[0].mxu0
        %v819 = vadd.f32 0.0, %v818
        %820 = vmatprep.mubr.f32.mxu0 %v369
        %821 = vmatmul.mubr.f32.gmra.mrb[0].mxu0 %v368
        %v822 = vpop.f32.mrb[0].mxu0
        %v823 = vadd.f32 0.0, %v822
        %v824 = vpop.f32.mrb[0].mxu0
        %v825 = vadd.f32 0.0, %v824
        %826 = vdwg.mxu0
        %827 = vmatprep.subr.mxu0 %v718
        %828 = vmatpush1.msra.mxu0 %v717
        %829 = vmatprep.subr.mxu0 %v720
        %830 = vmatpush1.msra.mxu0 %v719
        %831 = vmatprep.subr.mxu0 %v722
        %832 = vmatpush1.msra.mxu0 %v721
        %833 = vmatprep.subr.mxu0 %v724
        %834 = vmatpush1.msra.mxu0 %v723
        %835 = vmatprep.subr.mxu0 0.0
        %836 = vmatpush1.msra.mxu0 0.0
        %837 = vmatprep.subr.mxu0 0.0
        %838 = vmatpush1.msra.mxu0 0.0
        %839 = vmatprep.subr.mxu0 0.0
        %840 = vmatpush1.msra.mxu0 0.0
        %841 = vmatprep.subr.mxu0 0.0
        %842 = vmatpush1.msra.mxu0 0.0
        %843 = vmatprep.subr.mxu0 0.0
        %844 = vmatpush1.msra.mxu0 0.0
        %845 = vmatprep.subr.mxu0 0.0
        %846 = vmatpush1.msra.mxu0 0.0
        %847 = vmatprep.subr.mxu0 0.0
        %848 = vmatpush1.msra.mxu0 0.0
        %849 = vmatprep.subr.mxu0 0.0
        %850 = vmatpush1.msra.mxu0 0.0
        %851 = vmatprep.subr.mxu0 0.0
        %852 = vmatpush1.msra.mxu0 0.0
        %853 = vmatprep.subr.mxu0 0.0
        %854 = vmatpush1.msra.mxu0 0.0
        %855 = vmatprep.subr.mxu0 0.0
        %856 = vmatpush1.msra.mxu0 0.0
        %857 = vmatprep.subr.mxu0 0.0
        %858 = vmatpush1.msra.mxu0 0.0
        %859 = vmatprep.subr.mxu0 0.0
        %860 = vmatpush1.msra.mxu0 0.0
        %861 = vmatprep.subr.mxu0 0.0
        %862 = vmatpush1.msra.mxu0 0.0
        %863 = vmatprep.subr.mxu0 0.0
        %864 = vmatpush1.msra.mxu0 0.0
        %865 = vmatprep.subr.mxu0 0.0
        %866 = vmatpush1.msra.mxu0 0.0
        %867 = vmatprep.subr.mxu0 0.0
        %868 = vmatpush1.msra.mxu0 0.0
        %869 = vmatprep.subr.mxu0 0.0
        %870 = vmatpush1.msra.mxu0 0.0
        %871 = vmatprep.subr.mxu0 0.0
        %872 = vmatpush1.msra.mxu0 0.0
        %873 = vmatprep.subr.mxu0 0.0
        %874 = vmatpush1.msra.mxu0 0.0
        %875 = vmatprep.subr.mxu0 0.0
        %876 = vmatpush1.msra.mxu0 0.0
        %877 = vmatprep.subr.mxu0 0.0
        %878 = vmatpush1.msra.mxu0 0.0
        %879 = vmatprep.subr.mxu0 0.0
        %880 = vmatpush1.msra.mxu0 0.0
        %881 = vmatprep.subr.mxu0 0.0
        %882 = vmatpush1.msra.mxu0 0.0
        %883 = vmatprep.subr.mxu0 0.0
        %884 = vmatpush1.msra.mxu0 0.0
        %885 = vmatprep.subr.mxu0 0.0
        %886 = vmatpush1.msra.mxu0 0.0
        %887 = vmatprep.subr.mxu0 0.0
        %888 = vmatpush1.msra.mxu0 0.0
        %889 = vmatprep.subr.mxu0 0.0
        %890 = vmatpush1.msra.mxu0 0.0
        %891 = vmatprep.mubr.f32.mxu0 0.0
        %892 = vmatmul.mubr.f32.gmra.mrb[0].mxu0 %v727
        %v893 = vpop.f32.mrb[0].mxu0
        %v894 = vadd.f32 %v805, %v893
        %v895 = vpop.f32.mrb[0].mxu0
        %v896 = vadd.f32 %v807, %v895
        %897 = vmatprep.mubr.f32.mxu0 0.0
        %898 = vmatmul.mubr.f32.gmra.mrb[0].mxu0 %v730
        %v899 = vpop.f32.mrb[0].mxu0
        %v900 = vadd.f32 %v811, %v899
        %v901 = vpop.f32.mrb[0].mxu0
        %v902 = vadd.f32 %v813, %v901
        %903 = vmatprep.mubr.f32.mxu0 0.0
        %904 = vmatmul.mubr.f32.gmra.mrb[0].mxu0 %v733
        %v905 = vpop.f32.mrb[0].mxu0
        %v906 = vadd.f32 %v817, %v905
        %v907 = vpop.f32.mrb[0].mxu0
        %v908 = vadd.f32 %v819, %v907
        %909 = vmatprep.mubr.f32.mxu0 0.0
        %910 = vmatmul.mubr.f32.gmra.mrb[0].mxu0 %v736
        %v911 = vpop.f32.mrb[0].mxu0
        %v912 = vadd.f32 %v823, %v911
        %v913 = vpop.f32.mrb[0].mxu0
        %v914 = vadd.f32 %v825, %v913
        %915 = vdwg.mxu0
        %916 = vset.pattern.permute.xlu0 2
        %917 = vperm.xlu0 %916, %v280
        %v918 = vpop.permute.xlu0 %917
        %920 = vset.pattern.permute.xlu0 2
        %921 = vperm.xlu0 %920, %v281
        %v922 = vpop.permute.xlu0 %921
        %924 = vset.pattern.permute.xlu0 2
        %925 = vperm.xlu0 %924, %v282
        %v926 = vpop.permute.xlu0 %925
        %928 = vset.pattern.permute.xlu0 2
        %929 = vperm.xlu0 %928, %v283
        %v930 = vpop.permute.xlu0 %929
        %v932 = vmul.f32 %v894, %v918
        %v933 = vmul.f32 %v896, %v918
        %v934 = vmul.f32 %v900, %v922
        %v935 = vmul.f32 %v902, %v922
        %v936 = vmul.f32 %v906, %v926
        %v937 = vmul.f32 %v908, %v926
        %v938 = vmul.f32 %v912, %v930
        %v939 = vmul.f32 %v914, %v930
        %940 = vset.pattern.permute.xlu0 3
        %941 = vperm.xlu0 %940, %v280
        %v942 = vpop.permute.xlu0 %941
        %944 = vset.pattern.permute.xlu0 3
        %945 = vperm.xlu0 %944, %v281
        %v946 = vpop.permute.xlu0 %945
        %948 = vset.pattern.permute.xlu0 3
        %949 = vperm.xlu0 %948, %v282
        %v950 = vpop.permute.xlu0 %949
        %952 = vset.pattern.permute.xlu0 3
        %953 = vperm.xlu0 %952, %v283
        %v954 = vpop.permute.xlu0 %953
        %v956 = vadd.f32 %v932, %v942
        %v957 = vadd.f32 %v933, %v942
        %v958 = vadd.f32 %v934, %v946
        %v959 = vadd.f32 %v935, %v946
        %v960 = vadd.f32 %v936, %v950
        %v961 = vadd.f32 %v937, %v950
        %v962 = vadd.f32 %v938, %v954
        %v963 = vadd.f32 %v939, %v954
        %v964 = vmax.f32 %v956, 0.0
        %v965 = vmax.f32 %v957, 0.0
        %v966 = vmax.f32 %v958, 0.0
        %v967 = vmax.f32 %v959, 0.0
        %v968 = vmax.f32 %v960, 0.0
        %v969 = vmax.f32 %v961, 0.0
        %v970 = vmax.f32 %v962, 0.0
        %v971 = vmax.f32 %v963, 0.0
        %v972 = vld [vmem:[#allocation7] sm:$0xff]
        %v973 = vld [vmem:[#allocation7 + $0x8] sm:$0xff]
        %v974 = vld [vmem:[#allocation7 + $0x10] sm:$0xff]
        %v975 = vld [vmem:[#allocation7 + $0x18] sm:$0xff]
        %v976 = vld [vmem:[#allocation7 + $0x20] sm:$0xff]
        %v977 = vld [vmem:[#allocation7 + $0x28] sm:$0xff]
        %v978 = vld [vmem:[#allocation7 + $0x30] sm:$0xff]
        %v979 = vld [vmem:[#allocation7 + $0x38] sm:$0xff]
        %v980 = vld [vmem:[#allocation7 + $0x40] sm:$0xff]
        %v981 = vld [vmem:[#allocation7 + $0x48] sm:$0xff]
        %v982 = vld [vmem:[#allocation7 + $0x50] sm:$0xff]
        %v983 = vld [vmem:[#allocation7 + $0x58] sm:$0xff]
        %984 = vrot.lane.b32.xlu0 %v964, 17
        %v985 = vpop.permute.xlu0 %984
        %986 = vrot.lane.b32.xlu0 %v966, 17
        %v987 = vpop.permute.xlu0 %986
        %988 = vrot.lane.b32.xlu0 %v968, 17
        %v989 = vpop.permute.xlu0 %988
        %990 = vrot.lane.b32.xlu0 %v970, 17
        %v991 = vpop.permute.xlu0 %990
        %992 = vrot.lane.b32.xlu0 %v965, 17
        %v993 = vpop.permute.xlu0 %992
        %994 = vrot.lane.b32.xlu0 %v967, 17
        %v995 = vpop.permute.xlu0 %994
        %996 = vrot.lane.b32.xlu0 %v969, 17
        %v997 = vpop.permute.xlu0 %996
        %998 = vrot.lane.b32.xlu0 %v971, 17
        %v999 = vpop.permute.xlu0 %998
        %v1000 = vsel %vm389, %v985, %v993
        %v1001 = vsel %vm389, %v987, %v995
        %v1002 = vsel %vm389, %v989, %v997
        %v1003 = vsel %vm389, %v991, %v999
        %v1004 = vsel %vm389, %v993, %v985
        %v1005 = vsel %vm389, %v995, %v987
        %v1006 = vsel %vm389, %v997, %v989
        %v1007 = vsel %vm389, %v999, %v991
        %v1008 = vmul.f32 %v1004, %v402
        %v1009 = vmul.f32 %v1000, %v406
        %v1010 = vmul.f32 %v1005, %v402
        %v1011 = vmul.f32 %v1001, %v406
        %v1012 = vmul.f32 %v1006, %v402
        %v1013 = vmul.f32 %v1002, %v406
        %v1014 = vmul.f32 %v1007, %v402
        %v1015 = vmul.f32 %v1003, %v406
        %1016 = vrot.lane.b32.xlu0 %v964, 16
        %v1017 = vpop.permute.xlu0 %1016
        %1018 = vrot.lane.b32.xlu0 %v966, 16
        %v1019 = vpop.permute.xlu0 %1018
        %1020 = vrot.lane.b32.xlu0 %v968, 16
        %v1021 = vpop.permute.xlu0 %1020
        %1022 = vrot.lane.b32.xlu0 %v970, 16
        %v1023 = vpop.permute.xlu0 %1022
        %1024 = vrot.lane.b32.xlu0 %v965, 16
        %v1025 = vpop.permute.xlu0 %1024
        %1026 = vrot.lane.b32.xlu0 %v967, 16
        %v1027 = vpop.permute.xlu0 %1026
        %1028 = vrot.lane.b32.xlu0 %v969, 16
        %v1029 = vpop.permute.xlu0 %1028
        %1030 = vrot.lane.b32.xlu0 %v971, 16
        %v1031 = vpop.permute.xlu0 %1030
        %v1032 = vsel %vm433, %v1017, %v1025
        %v1033 = vsel %vm433, %v1019, %v1027
        %v1034 = vsel %vm433, %v1021, %v1029
        %v1035 = vsel %vm433, %v1023, %v1031
        %v1036 = vsel %vm433, %v1025, %v1017
        %v1037 = vsel %vm433, %v1027, %v1019
        %v1038 = vsel %vm433, %v1029, %v1021
        %v1039 = vsel %vm433, %v1031, %v1023
        %v1040 = vmul.f32 %v1036, %v446
        %v1041 = vmul.f32 %v1032, %v450
        %v1042 = vmul.f32 %v1037, %v446
        %v1043 = vmul.f32 %v1033, %v450
        %v1044 = vmul.f32 %v1038, %v446
        %v1045 = vmul.f32 %v1034, %v450
        %v1046 = vmul.f32 %v1039, %v446
        %v1047 = vmul.f32 %v1035, %v450
        %1048 = vrot.lane.b32.xlu0 %v964, 15
        %v1049 = vpop.permute.xlu0 %1048
        %1050 = vrot.lane.b32.xlu0 %v966, 15
        %v1051 = vpop.permute.xlu0 %1050
        %1052 = vrot.lane.b32.xlu0 %v968, 15
        %v1053 = vpop.permute.xlu0 %1052
        %1054 = vrot.lane.b32.xlu0 %v970, 15
        %v1055 = vpop.permute.xlu0 %1054
        %1056 = vrot.lane.b32.xlu0 %v965, 15
        %v1057 = vpop.permute.xlu0 %1056
        %1058 = vrot.lane.b32.xlu0 %v967, 15
        %v1059 = vpop.permute.xlu0 %1058
        %1060 = vrot.lane.b32.xlu0 %v969, 15
        %v1061 = vpop.permute.xlu0 %1060
        %1062 = vrot.lane.b32.xlu0 %v971, 15
        %v1063 = vpop.permute.xlu0 %1062
        %v1064 = vsel %vm477, %v1049, %v1057
        %v1065 = vsel %vm477, %v1051, %v1059
        %v1066 = vsel %vm477, %v1053, %v1061
        %v1067 = vsel %vm477, %v1055, %v1063
        %v1068 = vsel %vm477, %v1057, %v1049
        %v1069 = vsel %vm477, %v1059, %v1051
        %v1070 = vsel %vm477, %v1061, %v1053
        %v1071 = vsel %vm477, %v1063, %v1055
        %v1072 = vmul.f32 %v1068, %v490
        %v1073 = vmul.f32 %v1064, %v494
        %v1074 = vmul.f32 %v1069, %v490
        %v1075 = vmul.f32 %v1065, %v494
        %v1076 = vmul.f32 %v1070, %v490
        %v1077 = vmul.f32 %v1066, %v494
        %v1078 = vmul.f32 %v1071, %v490
        %v1079 = vmul.f32 %v1067, %v494
        %1080 = vrot.lane.b32.xlu0 %v964, 1
        %v1081 = vpop.permute.xlu0 %1080
        %1082 = vrot.lane.b32.xlu0 %v966, 1
        %v1083 = vpop.permute.xlu0 %1082
        %1084 = vrot.lane.b32.xlu0 %v968, 1
        %v1085 = vpop.permute.xlu0 %1084
        %1086 = vrot.lane.b32.xlu0 %v970, 1
        %v1087 = vpop.permute.xlu0 %1086
        %1088 = vrot.lane.b32.xlu0 %v965, 1
        %v1089 = vpop.permute.xlu0 %1088
        %1090 = vrot.lane.b32.xlu0 %v967, 1
        %v1091 = vpop.permute.xlu0 %1090
        %1092 = vrot.lane.b32.xlu0 %v969, 1
        %v1093 = vpop.permute.xlu0 %1092
        %1094 = vrot.lane.b32.xlu0 %v971, 1
        %v1095 = vpop.permute.xlu0 %1094
        %v1096 = vsel %vm521, %v1081, %v1089
        %v1097 = vsel %vm521, %v1083, %v1091
        %v1098 = vsel %vm521, %v1085, %v1093
        %v1099 = vsel %vm521, %v1087, %v1095
        %v1100 = vsel %vm521, %v1089, %v1081
        %v1101 = vsel %vm521, %v1091, %v1083
        %v1102 = vsel %vm521, %v1093, %v1085
        %v1103 = vsel %vm521, %v1095, %v1087
        %v1104 = vmul.f32 %v1100, %v534
        %v1105 = vmul.f32 %v1096, %v538
        %v1106 = vmul.f32 %v1101, %v534
        %v1107 = vmul.f32 %v1097, %v538
        %v1108 = vmul.f32 %v1102, %v534
        %v1109 = vmul.f32 %v1098, %v538
        %v1110 = vmul.f32 %v1103, %v534
        %v1111 = vmul.f32 %v1099, %v538
        %1112 = vrot.lane.b32.xlu0 %v964, 127
        %v1113 = vpop.permute.xlu0 %1112
        %1114 = vrot.lane.b32.xlu0 %v966, 127
        %v1115 = vpop.permute.xlu0 %1114
        %1116 = vrot.lane.b32.xlu0 %v968, 127
        %v1117 = vpop.permute.xlu0 %1116
        %1118 = vrot.lane.b32.xlu0 %v970, 127
        %v1119 = vpop.permute.xlu0 %1118
        %1120 = vrot.lane.b32.xlu0 %v965, 127
        %v1121 = vpop.permute.xlu0 %1120
        %1122 = vrot.lane.b32.xlu0 %v967, 127
        %v1123 = vpop.permute.xlu0 %1122
        %1124 = vrot.lane.b32.xlu0 %v969, 127
        %v1125 = vpop.permute.xlu0 %1124
        %1126 = vrot.lane.b32.xlu0 %v971, 127
        %v1127 = vpop.permute.xlu0 %1126
        %v1128 = vsel %vm565, %v1113, %v1121
        %v1129 = vsel %vm565, %v1115, %v1123
        %v1130 = vsel %vm565, %v1117, %v1125
        %v1131 = vsel %vm565, %v1119, %v1127
        %v1132 = vsel %vm565, %v1121, %v1113
        %v1133 = vsel %vm565, %v1123, %v1115
        %v1134 = vsel %vm565, %v1125, %v1117
        %v1135 = vsel %vm565, %v1127, %v1119
        %v1136 = vmul.f32 %v1128, %v578
        %v1137 = vmul.f32 %v1132, %v582
        %v1138 = vmul.f32 %v1129, %v578
        %v1139 = vmul.f32 %v1133, %v582
        %v1140 = vmul.f32 %v1130, %v578
        %v1141 = vmul.f32 %v1134, %v582
        %v1142 = vmul.f32 %v1131, %v578
        %v1143 = vmul.f32 %v1135, %v582
        %1144 = vrot.lane.b32.xlu0 %v964, 113
        %v1145 = vpop.permute.xlu0 %1144
        %1146 = vrot.lane.b32.xlu0 %v966, 113
        %v1147 = vpop.permute.xlu0 %1146
        %1148 = vrot.lane.b32.xlu0 %v968, 113
        %v1149 = vpop.permute.xlu0 %1148
        %1150 = vrot.lane.b32.xlu0 %v970, 113
        %v1151 = vpop.permute.xlu0 %1150
        %1152 = vrot.lane.b32.xlu0 %v965, 113
        %v1153 = vpop.permute.xlu0 %1152
        %1154 = vrot.lane.b32.xlu0 %v967, 113
        %v1155 = vpop.permute.xlu0 %1154
        %1156 = vrot.lane.b32.xlu0 %v969, 113
        %v1157 = vpop.permute.xlu0 %1156
        %1158 = vrot.lane.b32.xlu0 %v971, 113
        %v1159 = vpop.permute.xlu0 %1158
        %v1160 = vsel %vm609, %v1145, %v1153
        %v1161 = vsel %vm609, %v1147, %v1155
        %v1162 = vsel %vm609, %v1149, %v1157
        %v1163 = vsel %vm609, %v1151, %v1159
        %v1164 = vsel %vm609, %v1153, %v1145
        %v1165 = vsel %vm609, %v1155, %v1147
        %v1166 = vsel %vm609, %v1157, %v1149
        %v1167 = vsel %vm609, %v1159, %v1151
        %v1168 = vmul.f32 %v1160, %v622
        %v1169 = vmul.f32 %v1164, %v626
        %v1170 = vmul.f32 %v1161, %v622
        %v1171 = vmul.f32 %v1165, %v626
        %v1172 = vmul.f32 %v1162, %v622
        %v1173 = vmul.f32 %v1166, %v626
        %v1174 = vmul.f32 %v1163, %v622
        %v1175 = vmul.f32 %v1167, %v626
        %1176 = vrot.lane.b32.xlu0 %v964, 112
        %v1177 = vpop.permute.xlu0 %1176
        %1178 = vrot.lane.b32.xlu0 %v966, 112
        %v1179 = vpop.permute.xlu0 %1178
        %1180 = vrot.lane.b32.xlu0 %v968, 112
        %v1181 = vpop.permute.xlu0 %1180
        %1182 = vrot.lane.b32.xlu0 %v970, 112
        %v1183 = vpop.permute.xlu0 %1182
        %1184 = vrot.lane.b32.xlu0 %v965, 112
        %v1185 = vpop.permute.xlu0 %1184
        %1186 = vrot.lane.b32.xlu0 %v967, 112
        %v1187 = vpop.permute.xlu0 %1186
        %1188 = vrot.lane.b32.xlu0 %v969, 112
        %v1189 = vpop.permute.xlu0 %1188
        %1190 = vrot.lane.b32.xlu0 %v971, 112
        %v1191 = vpop.permute.xlu0 %1190
        %v1192 = vsel %vm653, %v1177, %v1185
        %v1193 = vsel %vm653, %v1179, %v1187
        %v1194 = vsel %vm653, %v1181, %v1189
        %v1195 = vsel %vm653, %v1183, %v1191
        %v1196 = vsel %vm653, %v1185, %v1177
        %v1197 = vsel %vm653, %v1187, %v1179
        %v1198 = vsel %vm653, %v1189, %v1181
        %v1199 = vsel %vm653, %v1191, %v1183
        %v1200 = vmul.f32 %v1192, %v666
        %v1201 = vmul.f32 %v1196, %v670
        %v1202 = vmul.f32 %v1193, %v666
        %v1203 = vmul.f32 %v1197, %v670
        %v1204 = vmul.f32 %v1194, %v666
        %v1205 = vmul.f32 %v1198, %v670
        %v1206 = vmul.f32 %v1195, %v666
        %v1207 = vmul.f32 %v1199, %v670
        %1208 = vrot.lane.b32.xlu0 %v964, 111
        %v1209 = vpop.permute.xlu0 %1208
        %1210 = vrot.lane.b32.xlu0 %v966, 111
        %v1211 = vpop.permute.xlu0 %1210
        %1212 = vrot.lane.b32.xlu0 %v968, 111
        %v1213 = vpop.permute.xlu0 %1212
        %1214 = vrot.lane.b32.xlu0 %v970, 111
        %v1215 = vpop.permute.xlu0 %1214
        %1216 = vrot.lane.b32.xlu0 %v965, 111
        %v1217 = vpop.permute.xlu0 %1216
        %1218 = vrot.lane.b32.xlu0 %v967, 111
        %v1219 = vpop.permute.xlu0 %1218
        %1220 = vrot.lane.b32.xlu0 %v969, 111
        %v1221 = vpop.permute.xlu0 %1220
        %1222 = vrot.lane.b32.xlu0 %v971, 111
        %v1223 = vpop.permute.xlu0 %1222
        %v1224 = vsel %vm697, %v1209, %v1217
        %v1225 = vsel %vm697, %v1211, %v1219
        %v1226 = vsel %vm697, %v1213, %v1221
        %v1227 = vsel %vm697, %v1215, %v1223
        %v1228 = vsel %vm697, %v1217, %v1209
        %v1229 = vsel %vm697, %v1219, %v1211
        %v1230 = vsel %vm697, %v1221, %v1213
        %v1231 = vsel %vm697, %v1223, %v1215
        %v1232 = vmul.f32 %v1224, %v710
        %v1233 = vmul.f32 %v1228, %v714
        %v1234 = vmul.f32 %v1225, %v710
        %v1235 = vmul.f32 %v1229, %v714
        %v1236 = vmul.f32 %v1226, %v710
        %v1237 = vmul.f32 %v1230, %v714
        %v1238 = vmul.f32 %v1227, %v710
        %v1239 = vmul.f32 %v1231, %v714
        %v1241 = vsel %vm725, %v974, 0
        %v1244 = vsel %vm725, %v977, 0
        %v1247 = vsel %vm725, %v980, 0
        %v1250 = vsel %vm725, %v983, 0
        %1252 = vmatprep.subr.mxu0 %v1009
        %1253 = vmatpush1.msra.mxu0 %v1008
        %1254 = vmatprep.subr.mxu0 %v1011
        %1255 = vmatpush1.msra.mxu0 %v1010
        %1256 = vmatprep.subr.mxu0 %v1013
        %1257 = vmatpush1.msra.mxu0 %v1012
        %1258 = vmatprep.subr.mxu0 %v1015
        %1259 = vmatpush1.msra.mxu0 %v1014
        %1260 = vmatprep.subr.mxu0 %v1041
        %1261 = vmatpush1.msra.mxu0 %v1040
        %1262 = vmatprep.subr.mxu0 %v1043
        %1263 = vmatpush1.msra.mxu0 %v1042
        %1264 = vmatprep.subr.mxu0 %v1045
        %1265 = vmatpush1.msra.mxu0 %v1044
        %1266 = vmatprep.subr.mxu0 %v1047
        %1267 = vmatpush1.msra.mxu0 %v1046
        %1268 = vmatprep.subr.mxu0 %v1073
        %1269 = vmatpush1.msra.mxu0 %v1072
        %1270 = vmatprep.subr.mxu0 %v1075
        %1271 = vmatpush1.msra.mxu0 %v1074
        %1272 = vmatprep.subr.mxu0 %v1077
        %1273 = vmatpush1.msra.mxu0 %v1076
        %1274 = vmatprep.subr.mxu0 %v1079
        %1275 = vmatpush1.msra.mxu0 %v1078
        %1276 = vmatprep.subr.mxu0 %v1105
        %1277 = vmatpush1.msra.mxu0 %v1104
        %1278 = vmatprep.subr.mxu0 %v1107
        %1279 = vmatpush1.msra.mxu0 %v1106
        %1280 = vmatprep.subr.mxu0 %v1109
        %1281 = vmatpush1.msra.mxu0 %v1108
        %1282 = vmatprep.subr.mxu0 %v1111
        %1283 = vmatpush1.msra.mxu0 %v1110
        %1284 = vmatprep.subr.mxu0 %v965
        %1285 = vmatpush1.msra.mxu0 %v964
        %1286 = vmatprep.subr.mxu0 %v967
        %1287 = vmatpush1.msra.mxu0 %v966
        %1288 = vmatprep.subr.mxu0 %v969
        %1289 = vmatpush1.msra.mxu0 %v968
        %1290 = vmatprep.subr.mxu0 %v971
        %1291 = vmatpush1.msra.mxu0 %v970
        %1292 = vmatprep.subr.mxu0 %v1137
        %1293 = vmatpush1.msra.mxu0 %v1136
        %1294 = vmatprep.subr.mxu0 %v1139
        %1295 = vmatpush1.msra.mxu0 %v1138
        %1296 = vmatprep.subr.mxu0 %v1141
        %1297 = vmatpush1.msra.mxu0 %v1140
        %1298 = vmatprep.subr.mxu0 %v1143
        %1299 = vmatpush1.msra.mxu0 %v1142
        %1300 = vmatprep.subr.mxu0 %v1169
        %1301 = vmatpush1.msra.mxu0 %v1168
        %1302 = vmatprep.subr.mxu0 %v1171
        %1303 = vmatpush1.msra.mxu0 %v1170
        %1304 = vmatprep.subr.mxu0 %v1173
        %1305 = vmatpush1.msra.mxu0 %v1172
        %1306 = vmatprep.subr.mxu0 %v1175
        %1307 = vmatpush1.msra.mxu0 %v1174
        %1308 = vmatprep.subr.mxu0 %v1201
        %1309 = vmatpush1.msra.mxu0 %v1200
        %1310 = vmatprep.subr.mxu0 %v1203
        %1311 = vmatpush1.msra.mxu0 %v1202
        %1312 = vmatprep.subr.mxu0 %v1205
        %1313 = vmatpush1.msra.mxu0 %v1204
        %1314 = vmatprep.subr.mxu0 %v1207
        %1315 = vmatpush1.msra.mxu0 %v1206
        %1316 = vmatprep.mubr.f32.mxu0 %v973
        %1317 = vmatmul.mubr.f32.gmra.mrb[0].mxu0 %v972
        %v1318 = vpop.f32.mrb[0].mxu0
        %v1319 = vadd.f32 %v272, %v1318
        %v1320 = vpop.f32.mrb[0].mxu0
        %v1321 = vadd.f32 %v273, %v1320
        %1322 = vmatprep.mubr.f32.mxu0 %v976
        %1323 = vmatmul.mubr.f32.gmra.mrb[0].mxu0 %v975
        %v1324 = vpop.f32.mrb[0].mxu0
        %v1325 = vadd.f32 %v274, %v1324
        %v1326 = vpop.f32.mrb[0].mxu0
        %v1327 = vadd.f32 %v275, %v1326
        %1328 = vmatprep.mubr.f32.mxu0 %v979
        %1329 = vmatmul.mubr.f32.gmra.mrb[0].mxu0 %v978
        %v1330 = vpop.f32.mrb[0].mxu0
        %v1331 = vadd.f32 %v276, %v1330
        %v1332 = vpop.f32.mrb[0].mxu0
        %v1333 = vadd.f32 %v277, %v1332
        %1334 = vmatprep.mubr.f32.mxu0 %v982
        %1335 = vmatmul.mubr.f32.gmra.mrb[0].mxu0 %v981
        %v1336 = vpop.f32.mrb[0].mxu0
        %v1337 = vadd.f32 %v278, %v1336
        %v1338 = vpop.f32.mrb[0].mxu0
        %v1339 = vadd.f32 %v279, %v1338
        %1340 = vdwg.mxu0
        %1341 = vmatprep.subr.mxu0 %v1233
        %1342 = vmatpush1.msra.mxu0 %v1232
        %1343 = vmatprep.subr.mxu0 %v1235
        %1344 = vmatpush1.msra.mxu0 %v1234
        %1345 = vmatprep.subr.mxu0 %v1237
        %1346 = vmatpush1.msra.mxu0 %v1236
        %1347 = vmatprep.subr.mxu0 %v1239
        %1348 = vmatpush1.msra.mxu0 %v1238
        %1349 = vmatprep.subr.mxu0 0.0
        %1350 = vmatpush1.msra.mxu0 0.0
        %1351 = vmatprep.subr.mxu0 0.0
        %1352 = vmatpush1.msra.mxu0 0.0
        %1353 = vmatprep.subr.mxu0 0.0
        %1354 = vmatpush1.msra.mxu0 0.0
        %1355 = vmatprep.subr.mxu0 0.0
        %1356 = vmatpush1.msra.mxu0 0.0
        %1357 = vmatprep.subr.mxu0 0.0
        %1358 = vmatpush1.msra.mxu0 0.0
        %1359 = vmatprep.subr.mxu0 0.0
        %1360 = vmatpush1.msra.mxu0 0.0
        %1361 = vmatprep.subr.mxu0 0.0
        %1362 = vmatpush1.msra.mxu0 0.0
        %1363 = vmatprep.subr.mxu0 0.0
        %1364 = vmatpush1.msra.mxu0 0.0
        %1365 = vmatprep.subr.mxu0 0.0
        %1366 = vmatpush1.msra.mxu0 0.0
        %1367 = vmatprep.subr.mxu0 0.0
        %1368 = vmatpush1.msra.mxu0 0.0
        %1369 = vmatprep.subr.mxu0 0.0
        %1370 = vmatpush1.msra.mxu0 0.0
        %1371 = vmatprep.subr.mxu0 0.0
        %1372 = vmatpush1.msra.mxu0 0.0
        %1373 = vmatprep.subr.mxu0 0.0
        %1374 = vmatpush1.msra.mxu0 0.0
        %1375 = vmatprep.subr.mxu0 0.0
        %1376 = vmatpush1.msra.mxu0 0.0
        %1377 = vmatprep.subr.mxu0 0.0
        %1378 = vmatpush1.msra.mxu0 0.0
        %1379 = vmatprep.subr.mxu0 0.0
        %1380 = vmatpush1.msra.mxu0 0.0
        %1381 = vmatprep.subr.mxu0 0.0
        %1382 = vmatpush1.msra.mxu0 0.0
        %1383 = vmatprep.subr.mxu0 0.0
        %1384 = vmatpush1.msra.mxu0 0.0
        %1385 = vmatprep.subr.mxu0 0.0
        %1386 = vmatpush1.msra.mxu0 0.0
        %1387 = vmatprep.subr.mxu0 0.0
        %1388 = vmatpush1.msra.mxu0 0.0
        %1389 = vmatprep.subr.mxu0 0.0
        %1390 = vmatpush1.msra.mxu0 0.0
        %1391 = vmatprep.subr.mxu0 0.0
        %1392 = vmatpush1.msra.mxu0 0.0
        %1393 = vmatprep.subr.mxu0 0.0
        %1394 = vmatpush1.msra.mxu0 0.0
        %1395 = vmatprep.subr.mxu0 0.0
        %1396 = vmatpush1.msra.mxu0 0.0
        %1397 = vmatprep.subr.mxu0 0.0
        %1398 = vmatpush1.msra.mxu0 0.0
        %1399 = vmatprep.subr.mxu0 0.0
        %1400 = vmatpush1.msra.mxu0 0.0
        %1401 = vmatprep.subr.mxu0 0.0
        %1402 = vmatpush1.msra.mxu0 0.0
        %1403 = vmatprep.subr.mxu0 0.0
        %1404 = vmatpush1.msra.mxu0 0.0
        %1405 = vmatprep.mubr.f32.mxu0 0.0
        %1406 = vmatmul.mubr.f32.gmra.mrb[0].mxu0 %v1241
        %v1407 = vpop.f32.mrb[0].mxu0
        %v1408 = vadd.f32 %v1319, %v1407
        %v1409 = vpop.f32.mrb[0].mxu0
        %v1410 = vadd.f32 %v1321, %v1409
        %1411 = vmatprep.mubr.f32.mxu0 0.0
        %1412 = vmatmul.mubr.f32.gmra.mrb[0].mxu0 %v1244
        %v1413 = vpop.f32.mrb[0].mxu0
        %v1414 = vadd.f32 %v1325, %v1413
        %v1415 = vpop.f32.mrb[0].mxu0
        %v1416 = vadd.f32 %v1327, %v1415
        %1417 = vmatprep.mubr.f32.mxu0 0.0
        %1418 = vmatmul.mubr.f32.gmra.mrb[0].mxu0 %v1247
        %v1419 = vpop.f32.mrb[0].mxu0
        %v1420 = vadd.f32 %v1331, %v1419
        %v1421 = vpop.f32.mrb[0].mxu0
        %v1422 = vadd.f32 %v1333, %v1421
        %1423 = vmatprep.mubr.f32.mxu0 0.0
        %1424 = vmatmul.mubr.f32.gmra.mrb[0].mxu0 %v1250
        %v1425 = vpop.f32.mrb[0].mxu0
        %v1426 = vadd.f32 %v1337, %v1425
        %v1427 = vpop.f32.mrb[0].mxu0
        %v1428 = vadd.f32 %v1339, %v1427
        %1429 = vdwg.mxu0
        %1430 = vst [vmem:[%s271] sm:$0xff] %v1408
        %1431 = vst [vmem:[%s271 + $0x8] sm:$0xff] %v1410
        %1432 = vst [vmem:[%s271 + $0x10] sm:$0xff] %v1414
        %1433 = vst [vmem:[%s271 + $0x18] sm:$0xff] %v1416
        %1434 = vst [vmem:[%s271 + $0x20] sm:$0xff] %v1420
        %1435 = vst [vmem:[%s271 + $0x28] sm:$0xff] %v1422
        %1436 = vst [vmem:[%s271 + $0x30] sm:$0xff] %v1426
        %1437 = vst [vmem:[%s271 + $0x38] sm:$0xff] %v1428
        %s1438 = sand.u32 %s141, 1
        %s1439 = scalar_lea.sflag [#allocation4], %s1438
        %s1440 = sand.u32 %s141, 1
        %s1441 = smul.addr %s1440, 64
        %s1442 = scalar_lea.vmem [#allocation8], %s1441
        // Predicated region
        $region53: #{tpu_custom_call.1} parent=39 // pred_check
          %p1443 = pneg %p151
        $region54: #{tpu_custom_call.1} parent=39 // pred_check_branch
          %1445 = sbr.rel (%p1443) target = $region56
        $region55: #{tpu_custom_call.1} parent=39 // pred_region
          %s1447 = ssub.s32 1024, 1024
          %1448 = vsyncadd %s1439, %s1447
          %s1449 = smul.addr %s23, 8
          %s1450 = smul.addr %s1449, 128
          %s1451 = scalar_lea.hbm %s5, %s1450
          %s1452 = sshll.u32 %s1442, 4
          %s1453 = int_to_ptr.vmem [resolvable:$true] %s1452
          %1458 = dma.vmem_to_hbm [thread:$0]  %s1453, 1024, %s1451, %s1439, 256, 256, 16
        $region56: #{tpu_custom_call.1} parent=39 // pred_fallthru
          _
      $region40: #{tpu_custom_call.1} parent=5 // pred_fallthru
        _
      %p1459 = scmp.le.s32.totalorder 2, %s18
      // Predicated region
      $region57: #{tpu_custom_call.1} parent=5 // pred_check
        %p1460 = pneg %p1459
      $region58: #{tpu_custom_call.1} parent=5 // pred_check_branch
        %1462 = sbr.rel (%p1460) target = $region60
      $region59: #{tpu_custom_call.1} parent=5 // pred_region
        %s1463 = ssub.s32 %s18, 2
        // Predicated region
        $region61: #{tpu_custom_call.1} parent=59 // pred_check
          %p1464 = pneg %p157
        $region62: #{tpu_custom_call.1} parent=59 // pred_check_branch
          %1466 = sbr.rel (%p1464) target = $region64
        $region63: #{tpu_custom_call.1} parent=59 // pred_region
          %s1467 = sand.u32 %s142, 1
          %s1468 = scalar_lea.sflag [#allocation4], %s1467
          %s1469 = sand.u32 %s142, 1
          %s1470 = smul.addr %s1469, 64
          %s1471 = scalar_lea.vmem [#allocation8], %s1470
          %1472 = dma.done %s1468, 1024
        $region64: #{tpu_custom_call.1} parent=59 // pred_fallthru
          _
      $region60: #{tpu_custom_call.1} parent=5 // pred_fallthru
        _
    $region6: #{tpu_custom_call.1} parent=1 // loop_footer
      %s22 = sadd.s32 1, %s18
    $region7: #{tpu_custom_call.1} parent=1 // loop_footer_branch
      %17 = sbr.rel target = $region3
    $region8: #{tpu_custom_call.1} parent=1 // loop_exit
      _
    %1473 = vsyncpa [#allocation3], 1
    %s1474 = scalar_lea.sflag [#allocation3], 1
    %1475 = vsyncpa %s1474, 1
    %1476 = vsyncpa [#allocation6], 1
    %1477 = vsyncpa [#allocation4], 1
    %s1478 = scalar_lea.sflag [#allocation4], 1
    %1479 = vsyncpa %s1478, 1

</llo_original>
